<compile_context>
chip_gen: v7x
topology: tpu7x:2x2x1
jax: 0.10.0
libtpu: 0.0.40
codegen_flags: <defaults>
</compile_context>

<pallas_src>
import math

import jax
import jax.numpy as jnp
from jax.experimental import pallas as pl
from jax.experimental.pallas import tpu as pltpu

# ---------------- model hyper-params (small, consistent with the module) ----
BATCH = 2
SEQ = 8
HIDDEN = 32
N_HEADS = 4
HEAD_DIM = HIDDEN // N_HEADS
FF_HIDDEN = HIDDEN * 4
N_LAYERS = 1
LN_EPS = 1e-6


def _gelu_tanh(x):
    # BERT GELU (tanh approximation), as in BERT-pytorch
    c = math.sqrt(2.0 / math.pi)
    return 0.5 * x * (1.0 + jnp.tanh(c * (x + 0.044715 * x * x * x)))


def _layernorm(v, g, b):
    # BERT-pytorch LayerNorm: (x - mean) / (std + eps) * g + b, torch std is unbiased.
    mu = jnp.mean(v, axis=-1, keepdims=True)
    d = v - mu
    var = jnp.sum(d * d, axis=-1, keepdims=True) * (1.0 / (HIDDEN - 1))
    return d / (jnp.sqrt(var) + LN_EPS) * g + b


def bert_kernel(
    x_ref,
    ln1g_ref, ln1b_ref,
    wqkv_ref, bqkv_ref, wo_ref, bo_ref,
    ln2g_ref, ln2b_ref,
    w1_ref, b1_ref, w2_ref, b2_ref,
    o_ref,
    act_ref, ctx_ref,
):
    layer = pl.program_id(0)

    # Load the full-batch activation into the VMEM-resident scratch once.
    @pl.when(layer == 0)
    def _():
        act_ref[...] = x_ref[...].astype(jnp.float32)

    x = act_ref[...]                               # (B*S, H) f32, layer-resident

    # ---- sublayer 1: x + MHA(LN1(x)) ----
    h = _layernorm(x, ln1g_ref[0], ln1b_ref[0])
    # Fused QKV projection: one full-width MXU matmul (Q columns pre-scaled by 1/sqrt(dH)).
    qkv = jnp.dot(h.astype(jnp.bfloat16), wqkv_ref[0],
                  preferred_element_type=jnp.float32) + bqkv_ref[0]   # (B*S, 3H)

    # Scaled dot-product attention per (batch, head): S = dH = 8 -> tiny static 2-D blocks.
    for b in range(BATCH):
        r0 = b * SEQ
        for hd in range(N_HEADS):
            c0 = hd * HEAD_DIM
            q_bh = qkv[r0:r0 + SEQ, c0:c0 + HEAD_DIM]                          # (S, dH)
            k_bh = qkv[r0:r0 + SEQ, HIDDEN + c0:HIDDEN + c0 + HEAD_DIM]
            v_bh = qkv[r0:r0 + SEQ, 2 * HIDDEN + c0:2 * HIDDEN + c0 + HEAD_DIM]
            s = jax.lax.dot_general(q_bh, k_bh, (((1,), (1,)), ((), ())),
                                    preferred_element_type=jnp.float32)        # (S, S)
            s = s - jnp.max(s, axis=-1, keepdims=True)
            p = jnp.exp(s)
            p = p / jnp.sum(p, axis=-1, keepdims=True)                         # exact softmax
            ctx_ref[r0:r0 + SEQ, c0:c0 + HEAD_DIM] = jnp.dot(
                p, v_bh, preferred_element_type=jnp.float32)

    # Output projection: one (B*S,H) x (H,H) matmul over the re-assembled context.
    attn = jnp.dot(ctx_ref[...].astype(jnp.bfloat16), wo_ref[0],
                   preferred_element_type=jnp.float32) + bo_ref[0]
    x1 = x + attn                                   # dropout == identity

    # ---- sublayer 2: x1 + FFN(LN2(x1)) ----
    h2 = _layernorm(x1, ln2g_ref[0], ln2b_ref[0])
    ff = jnp.dot(h2.astype(jnp.bfloat16), w1_ref[0],
                 preferred_element_type=jnp.float32) + b1_ref[0]
    ff = _gelu_tanh(ff)
    ff = jnp.dot(ff.astype(jnp.bfloat16), w2_ref[0],
                 preferred_element_type=jnp.float32) + b2_ref[0]
    x2 = x1 + ff

    act_ref[...] = x2                               # carry to next layer

    @pl.when(layer == pl.num_programs(0) - 1)
    def _():
        o_ref[...] = x2.astype(o_ref.dtype)


def bert_forward_pallas(x, params):
    """x: (B, S, H). params: 12 arrays, each stacked with a leading layer dim L."""
    B, S, H = x.shape
    L = params[0].shape[0]
    BS = B * S
    x2d = x.reshape(BS, H)                          # fold batch onto the sublane axis

    def layer_spec(p):
        nz = p.ndim - 1
        # One layer's worth per grid step, indexed only by the layer axis l ->
        # each layer's weights are DMA'd exactly once for the whole batch.
        return pl.BlockSpec((1,) + tuple(p.shape[1:]),
                            lambda l, _nz=nz: (l,) + (0,) * _nz)

    in_specs = [pl.BlockSpec((BS, H), lambda l: (0, 0))]
    in_specs += [layer_spec(p) for p in params]

    # Cost estimate with weights counted once (matches actual streaming).
    flops = L * (2 * BS * H * (3 * H)                      # fused QKV
                 + 4 * B * N_HEADS * S * S * HEAD_DIM      # scores + context
                 + 2 * BS * H * H                          # output projection
                 + 4 * BS * H * FF_HIDDEN)                 # FFN
    transcendentals = L * (B * N_HEADS * S * S + BS * FF_HIDDEN + 2 * BS)
    bytes_accessed = (2 * BS * H * 4
                      + int(sum(p.size * p.dtype.itemsize for p in params)))

    out2d = pl.pallas_call(
        bert_kernel,
        out_shape=jax.ShapeDtypeStruct((BS, H), x.dtype),
        grid=(L,),
        in_specs=in_specs,
        out_specs=pl.BlockSpec((BS, H), lambda l: (0, 0)),
        scratch_shapes=[pltpu.VMEM((BS, H), jnp.float32),   # layer-resident activation
                        pltpu.VMEM((BS, H), jnp.float32)],  # attention context assembly
        compiler_params=pltpu.CompilerParams(
            dimension_semantics=("arbitrary",)),
        cost_estimate=pl.CostEstimate(
            flops=flops,
            transcendentals=transcendentals,
            bytes_accessed=bytes_accessed),
    )(x2d, *params)
    return out2d.reshape(B, S, H)


def init_params(key, n_layers=N_LAYERS):
    inv_scale = 1.0 / math.sqrt(HEAD_DIM)

    def one_layer(k):
        ks = jax.random.split(k, 6)
        std = 0.02

        def lin(kk, din, dout):
            w = std * jax.random.normal(kk, (din, dout), jnp.float32)
            b = jnp.zeros((1, dout), jnp.float32)
            return w, b

        wq, bq = lin(ks[0], HIDDEN, HIDDEN)
        wk, bk = lin(ks[1], HIDDEN, HIDDEN)
        wv, bv = lin(ks[2], HIDDEN, HIDDEN)
        wo, bo = lin(ks[3], HIDDEN, HIDDEN)
        w1, b1 = lin(ks[4], HIDDEN, FF_HIDDEN)
        w2, b2 = lin(ks[5], FF_HIDDEN, HIDDEN)

        # Fuse Q/K/V into one (H, 3H) matrix; fold the 1/sqrt(dH) score scale into Q.
        wqkv = jnp.concatenate([wq * inv_scale, wk, wv], axis=1)       # (H, 3H)
        bqkv = jnp.concatenate([bq * inv_scale, bk, bv], axis=1)       # (1, 3H)

        bf = lambda w: w.astype(jnp.bfloat16)      # bf16 MXU operands, f32 accumulate
        ln1g = jnp.ones((1, HIDDEN), jnp.float32)
        ln1b = jnp.zeros((1, HIDDEN), jnp.float32)
        ln2g = jnp.ones((1, HIDDEN), jnp.float32)
        ln2b = jnp.zeros((1, HIDDEN), jnp.float32)
        return (ln1g, ln1b,
                bf(wqkv), bqkv, bf(wo), bo,
                ln2g, ln2b,
                bf(w1), b1, bf(w2), b2)

    layers = [one_layer(jax.random.fold_in(key, i)) for i in range(n_layers)]
    # Stack each of the 12 params along a leading layer dim.
    return tuple(
        jnp.stack([layers[i][j] for i in range(n_layers)], axis=0)
        for j in range(len(layers[0]))
    )


if __name__ == "__main__":
    key = jax.random.PRNGKey(0)
    k_x, k_p = jax.random.split(key)
    x = jax.random.normal(k_x, (BATCH, SEQ, HIDDEN), jnp.float32)
    params = init_params(k_p, N_LAYERS)

    fwd = jax.jit(bert_forward_pallas)
    out = fwd(x, params)
    jax.block_until_ready(out)
    assert out.shape == (BATCH, SEQ, HIDDEN)
    assert bool(jnp.all(jnp.isfinite(out)))
    print("KERNEL_OK")
</pallas_src>

<mosaic_0001>
module attributes {stable_mosaic.version = 11 : i64} {
  func.func @bert_kernel(%arg0: i32, %arg1: memref<16x32xf32, #tpu.memory_space<vmem>>, %arg2: memref<1x1x32xf32, #tpu.memory_space<vmem>>, %arg3: memref<1x1x32xf32, #tpu.memory_space<vmem>>, %arg4: memref<1x32x96xbf16, #tpu.memory_space<vmem>>, %arg5: memref<1x1x96xf32, #tpu.memory_space<vmem>>, %arg6: memref<1x32x32xbf16, #tpu.memory_space<vmem>>, %arg7: memref<1x1x32xf32, #tpu.memory_space<vmem>>, %arg8: memref<1x1x32xf32, #tpu.memory_space<vmem>>, %arg9: memref<1x1x32xf32, #tpu.memory_space<vmem>>, %arg10: memref<1x32x128xbf16, #tpu.memory_space<vmem>>, %arg11: memref<1x1x128xf32, #tpu.memory_space<vmem>>, %arg12: memref<1x128x32xbf16, #tpu.memory_space<vmem>>, %arg13: memref<1x1x32xf32, #tpu.memory_space<vmem>>, %arg14: memref<16x32xf32, #tpu.memory_space<vmem>>, %arg15: memref<16x32xf32, #tpu.memory_space<vmem>>, %arg16: memref<16x32xf32, #tpu.memory_space<vmem>>) attributes {dimension_semantics = [#tpu.dimension_semantics<arbitrary>], iteration_bounds = array<i64: 1>, scalar_prefetch = 0 : i64, scratch_operands = 2 : i64, tpu.core_type = #tpu.core_type<tc>, window_params = [{pipeline_mode = #tpu.pipeline_mode<synchronous>, transform_indices = @transform_0, window_bounds = array<i64: 16, 32>}, {transform_indices = @transform_1, window_bounds = array<i64: 1, 1, 32>}, {transform_indices = @transform_2, window_bounds = array<i64: 1, 1, 32>}, {transform_indices = @transform_3, window_bounds = array<i64: 1, 32, 96>}, {transform_indices = @transform_4, window_bounds = array<i64: 1, 1, 96>}, {transform_indices = @transform_5, window_bounds = array<i64: 1, 32, 32>}, {transform_indices = @transform_6, window_bounds = array<i64: 1, 1, 32>}, {transform_indices = @transform_7, window_bounds = array<i64: 1, 1, 32>}, {transform_indices = @transform_8, window_bounds = array<i64: 1, 1, 32>}, {transform_indices = @transform_9, window_bounds = array<i64: 1, 32, 128>}, {transform_indices = @transform_10, window_bounds = array<i64: 1, 1, 128>}, {transform_indices = @transform_11, window_bounds = array<i64: 1, 128, 32>}, {transform_indices = @transform_12, window_bounds = array<i64: 1, 1, 32>}, {pipeline_mode = #tpu.pipeline_mode<synchronous>, transform_indices = @transform_13, window_bounds = array<i64: 16, 32>}]} {
    %c0_i32 = arith.constant 0 : i32
    %0 = arith.cmpi eq, %arg0, %c0_i32 : i32
    %1 = arith.extui %0 : i1 to i32
    %c0_i32_0 = arith.constant 0 : i32
    %2 = arith.cmpi ne, %1, %c0_i32_0 : i32
    scf.if %2 {
      %c0_106 = arith.constant 0 : index
      %c0_107 = arith.constant 0 : index
      %224 = vector.load %arg1[%c0_106, %c0_107] : memref<16x32xf32, #tpu.memory_space<vmem>>, vector<16x32xf32>
      %c0_108 = arith.constant 0 : index
      %c0_109 = arith.constant 0 : index
      %225 = vector.load %arg15[%c0_108, %c0_109] : memref<16x32xf32, #tpu.memory_space<vmem>>, vector<16x32xf32>
      tpu.vector_store %arg15[%c0_108, %c0_109], %224 {strides = array<i32>} : memref<16x32xf32, #tpu.memory_space<vmem>>, vector<16x32xf32>,
    } else {
    }
    %c0 = arith.constant 0 : index
    %c0_1 = arith.constant 0 : index
    %3 = vector.load %arg15[%c0, %c0_1] : memref<16x32xf32, #tpu.memory_space<vmem>>, vector<16x32xf32>
    %c0_2 = arith.constant 0 : index
    %c0_3 = arith.constant 0 : index
    %c0_4 = arith.constant 0 : index
    %4 = vector.load %arg2[%c0_2, %c0_3, %c0_4] : memref<1x1x32xf32, #tpu.memory_space<vmem>>, vector<1x1x32xf32>
    %5 = vector.shape_cast %4 : vector<1x1x32xf32> to vector<1x32xf32>
    %c0_5 = arith.constant 0 : index
    %c0_6 = arith.constant 0 : index
    %c0_7 = arith.constant 0 : index
    %6 = vector.load %arg3[%c0_5, %c0_6, %c0_7] : memref<1x1x32xf32, #tpu.memory_space<vmem>>, vector<1x1x32xf32>
    %7 = vector.shape_cast %6 : vector<1x1x32xf32> to vector<1x32xf32>
    %cst = arith.constant dense<0.000000e+00> : vector<16xf32>
    %8 = vector.multi_reduction <add>, %3, %cst [1] : vector<16x32xf32> to vector<16xf32>
    %9 = vector.shape_cast %8 : vector<16xf32> to vector<16x1xf32>
    %cst_8 = arith.constant 3.200000e+01 : f32
    %10 = vector.broadcast %cst_8 : f32 to vector<16x1xf32>
    %11 = arith.divf %9, %10 : vector<16x1xf32>
    %12 = vector.broadcast %11 : vector<16x1xf32> to vector<16x32xf32>
    %13 = arith.subf %3, %12 : vector<16x32xf32>
    %14 = arith.mulf %13, %13 : vector<16x32xf32>
    %cst_9 = arith.constant dense<0.000000e+00> : vector<16xf32>
    %15 = vector.multi_reduction <add>, %14, %cst_9 [1] : vector<16x32xf32> to vector<16xf32>
    %16 = vector.shape_cast %15 : vector<16xf32> to vector<16x1xf32>
    %cst_10 = arith.constant 0.0322580636 : f32
    %17 = vector.broadcast %cst_10 : f32 to vector<16x1xf32>
    %18 = arith.mulf %16, %17 : vector<16x1xf32>
    %19 = math.sqrt %18 : vector<16x1xf32>
    %cst_11 = arith.constant 9.99999997E-7 : f32
    %20 = vector.broadcast %cst_11 : f32 to vector<16x1xf32>
    %21 = arith.addf %19, %20 : vector<16x1xf32>
    %22 = vector.broadcast %21 : vector<16x1xf32> to vector<16x32xf32>
    %23 = arith.divf %13, %22 : vector<16x32xf32>
    %24 = vector.broadcast %5 : vector<1x32xf32> to vector<16x32xf32>
    %25 = arith.mulf %23, %24 : vector<16x32xf32>
    %26 = vector.broadcast %7 : vector<1x32xf32> to vector<16x32xf32>
    %27 = arith.addf %25, %26 : vector<16x32xf32>
    %28 = arith.truncf %27 : vector<16x32xf32> to vector<16x32xbf16>
    %c0_12 = arith.constant 0 : index
    %c0_13 = arith.constant 0 : index
    %c0_14 = arith.constant 0 : index
    %29 = vector.load %arg4[%c0_12, %c0_13, %c0_14] : memref<1x32x96xbf16, #tpu.memory_space<vmem>>, vector<1x32x96xbf16>
    %30 = vector.shape_cast %29 : vector<1x32x96xbf16> to vector<32x96xbf16>
    %cst_15 = arith.constant dense<0.000000e+00> : vector<16x96xf32>
    %31 = tpu.matmul %28, %30, %cst_15 {dimension_numbers = #tpu.dot_dimension_numbers<[1], [0], [0], [1], [0, 0, 1, 1], [], []>} : vector<16x32xbf16>, vector<32x96xbf16>, vector<16x96xf32> -> vector<16x96xf32>
    %c0_16 = arith.constant 0 : index
    %c0_17 = arith.constant 0 : index
    %c0_18 = arith.constant 0 : index
    %32 = vector.load %arg5[%c0_16, %c0_17, %c0_18] : memref<1x1x96xf32, #tpu.memory_space<vmem>>, vector<1x1x96xf32>
    %33 = vector.shape_cast %32 : vector<1x1x96xf32> to vector<1x96xf32>
    %34 = vector.broadcast %33 : vector<1x96xf32> to vector<16x96xf32>
    %35 = arith.addf %31, %34 : vector<16x96xf32>
    %36 = vector.extract_strided_slice %35 {offsets = [0, 0], sizes = [8, 8], strides = [1, 1]} : vector<16x96xf32> to vector<8x8xf32>
    %37 = vector.extract_strided_slice %35 {offsets = [0, 32], sizes = [8, 8], strides = [1, 1]} : vector<16x96xf32> to vector<8x8xf32>
    %38 = vector.extract_strided_slice %35 {offsets = [0, 64], sizes = [8, 8], strides = [1, 1]} : vector<16x96xf32> to vector<8x8xf32>
    %cst_19 = arith.constant dense<0.000000e+00> : vector<8x8xf32>
    %39 = tpu.matmul %36, %37, %cst_19 {dimension_numbers = #tpu.dot_dimension_numbers<[1], [1], [0], [0], [0, 0, 1, 0], [], []>} : vector<8x8xf32>, vector<8x8xf32>, vector<8x8xf32> -> vector<8x8xf32>
    %cst_20 = arith.constant dense<0xFF800000> : vector<8xf32>
    %40 = vector.multi_reduction <maximumf>, %39, %cst_20 [1] : vector<8x8xf32> to vector<8xf32>
    %41 = vector.shape_cast %40 : vector<8xf32> to vector<8x1xf32>
    %42 = vector.broadcast %41 : vector<8x1xf32> to vector<8x8xf32>
    %43 = arith.subf %39, %42 : vector<8x8xf32>
    %44 = math.exp %43 : vector<8x8xf32>
    %cst_21 = arith.constant dense<0.000000e+00> : vector<8xf32>
    %45 = vector.multi_reduction <add>, %44, %cst_21 [1] : vector<8x8xf32> to vector<8xf32>
    %46 = vector.shape_cast %45 : vector<8xf32> to vector<8x1xf32>
    %47 = vector.broadcast %46 : vector<8x1xf32> to vector<8x8xf32>
    %48 = arith.divf %44, %47 : vector<8x8xf32>
    %cst_22 = arith.constant dense<0.000000e+00> : vector<8x8xf32>
    %49 = tpu.matmul %48, %38, %cst_22 {dimension_numbers = #tpu.dot_dimension_numbers<[1], [0], [0], [1], [0, 0, 1, 1], [], []>} : vector<8x8xf32>, vector<8x8xf32>, vector<8x8xf32> -> vector<8x8xf32>
    %c0_23 = arith.constant 0 : index
    %c0_24 = arith.constant 0 : index
    %50 = vector.load %arg16[%c0_23, %c0_24] : memref<16x32xf32, #tpu.memory_space<vmem>>, vector<8x8xf32>
    tpu.vector_store %arg16[%c0_23, %c0_24], %49 {strides = array<i32>} : memref<16x32xf32, #tpu.memory_space<vmem>>, vector<8x8xf32>,
    %51 = vector.extract_strided_slice %35 {offsets = [0, 8], sizes = [8, 8], strides = [1, 1]} : vector<16x96xf32> to vector<8x8xf32>
    %52 = vector.extract_strided_slice %35 {offsets = [0, 40], sizes = [8, 8], strides = [1, 1]} : vector<16x96xf32> to vector<8x8xf32>
    %53 = vector.extract_strided_slice %35 {offsets = [0, 72], sizes = [8, 8], strides = [1, 1]} : vector<16x96xf32> to vector<8x8xf32>
    %cst_25 = arith.constant dense<0.000000e+00> : vector<8x8xf32>
    %54 = tpu.matmul %51, %52, %cst_25 {dimension_numbers = #tpu.dot_dimension_numbers<[1], [1], [0], [0], [0, 0, 1, 0], [], []>} : vector<8x8xf32>, vector<8x8xf32>, vector<8x8xf32> -> vector<8x8xf32>
    %cst_26 = arith.constant dense<0xFF800000> : vector<8xf32>
    %55 = vector.multi_reduction <maximumf>, %54, %cst_26 [1] : vector<8x8xf32> to vector<8xf32>
    %56 = vector.shape_cast %55 : vector<8xf32> to vector<8x1xf32>
    %57 = vector.broadcast %56 : vector<8x1xf32> to vector<8x8xf32>
    %58 = arith.subf %54, %57 : vector<8x8xf32>
    %59 = math.exp %58 : vector<8x8xf32>
    %cst_27 = arith.constant dense<0.000000e+00> : vector<8xf32>
    %60 = vector.multi_reduction <add>, %59, %cst_27 [1] : vector<8x8xf32> to vector<8xf32>
    %61 = vector.shape_cast %60 : vector<8xf32> to vector<8x1xf32>
    %62 = vector.broadcast %61 : vector<8x1xf32> to vector<8x8xf32>
    %63 = arith.divf %59, %62 : vector<8x8xf32>
    %cst_28 = arith.constant dense<0.000000e+00> : vector<8x8xf32>
    %64 = tpu.matmul %63, %53, %cst_28 {dimension_numbers = #tpu.dot_dimension_numbers<[1], [0], [0], [1], [0, 0, 1, 1], [], []>} : vector<8x8xf32>, vector<8x8xf32>, vector<8x8xf32> -> vector<8x8xf32>
    %c0_29 = arith.constant 0 : index
    %c8 = arith.constant 8 : index
    %65 = vector.load %arg16[%c0_29, %c8] : memref<16x32xf32, #tpu.memory_space<vmem>>, vector<8x8xf32>
    tpu.vector_store %arg16[%c0_29, %c8], %64 {strides = array<i32>} : memref<16x32xf32, #tpu.memory_space<vmem>>, vector<8x8xf32>,
    %66 = vector.extract_strided_slice %35 {offsets = [0, 16], sizes = [8, 8], strides = [1, 1]} : vector<16x96xf32> to vector<8x8xf32>
    %67 = vector.extract_strided_slice %35 {offsets = [0, 48], sizes = [8, 8], strides = [1, 1]} : vector<16x96xf32> to vector<8x8xf32>
    %68 = vector.extract_strided_slice %35 {offsets = [0, 80], sizes = [8, 8], strides = [1, 1]} : vector<16x96xf32> to vector<8x8xf32>
    %cst_30 = arith.constant dense<0.000000e+00> : vector<8x8xf32>
    %69 = tpu.matmul %66, %67, %cst_30 {dimension_numbers = #tpu.dot_dimension_numbers<[1], [1], [0], [0], [0, 0, 1, 0], [], []>} : vector<8x8xf32>, vector<8x8xf32>, vector<8x8xf32> -> vector<8x8xf32>
    %cst_31 = arith.constant dense<0xFF800000> : vector<8xf32>
    %70 = vector.multi_reduction <maximumf>, %69, %cst_31 [1] : vector<8x8xf32> to vector<8xf32>
    %71 = vector.shape_cast %70 : vector<8xf32> to vector<8x1xf32>
    %72 = vector.broadcast %71 : vector<8x1xf32> to vector<8x8xf32>
    %73 = arith.subf %69, %72 : vector<8x8xf32>
    %74 = math.exp %73 : vector<8x8xf32>
    %cst_32 = arith.constant dense<0.000000e+00> : vector<8xf32>
    %75 = vector.multi_reduction <add>, %74, %cst_32 [1] : vector<8x8xf32> to vector<8xf32>
    %76 = vector.shape_cast %75 : vector<8xf32> to vector<8x1xf32>
    %77 = vector.broadcast %76 : vector<8x1xf32> to vector<8x8xf32>
    %78 = arith.divf %74, %77 : vector<8x8xf32>
    %cst_33 = arith.constant dense<0.000000e+00> : vector<8x8xf32>
    %79 = tpu.matmul %78, %68, %cst_33 {dimension_numbers = #tpu.dot_dimension_numbers<[1], [0], [0], [1], [0, 0, 1, 1], [], []>} : vector<8x8xf32>, vector<8x8xf32>, vector<8x8xf32> -> vector<8x8xf32>
    %c0_34 = arith.constant 0 : index
    %c16 = arith.constant 16 : index
    %80 = vector.load %arg16[%c0_34, %c16] : memref<16x32xf32, #tpu.memory_space<vmem>>, vector<8x8xf32>
    tpu.vector_store %arg16[%c0_34, %c16], %79 {strides = array<i32>} : memref<16x32xf32, #tpu.memory_space<vmem>>, vector<8x8xf32>,
    %81 = vector.extract_strided_slice %35 {offsets = [0, 24], sizes = [8, 8], strides = [1, 1]} : vector<16x96xf32> to vector<8x8xf32>
    %82 = vector.extract_strided_slice %35 {offsets = [0, 56], sizes = [8, 8], strides = [1, 1]} : vector<16x96xf32> to vector<8x8xf32>
    %83 = vector.extract_strided_slice %35 {offsets = [0, 88], sizes = [8, 8], strides = [1, 1]} : vector<16x96xf32> to vector<8x8xf32>
    %cst_35 = arith.constant dense<0.000000e+00> : vector<8x8xf32>
    %84 = tpu.matmul %81, %82, %cst_35 {dimension_numbers = #tpu.dot_dimension_numbers<[1], [1], [0], [0], [0, 0, 1, 0], [], []>} : vector<8x8xf32>, vector<8x8xf32>, vector<8x8xf32> -> vector<8x8xf32>
    %cst_36 = arith.constant dense<0xFF800000> : vector<8xf32>
    %85 = vector.multi_reduction <maximumf>, %84, %cst_36 [1] : vector<8x8xf32> to vector<8xf32>
    %86 = vector.shape_cast %85 : vector<8xf32> to vector<8x1xf32>
    %87 = vector.broadcast %86 : vector<8x1xf32> to vector<8x8xf32>
    %88 = arith.subf %84, %87 : vector<8x8xf32>
    %89 = math.exp %88 : vector<8x8xf32>
    %cst_37 = arith.constant dense<0.000000e+00> : vector<8xf32>
    %90 = vector.multi_reduction <add>, %89, %cst_37 [1] : vector<8x8xf32> to vector<8xf32>
    %91 = vector.shape_cast %90 : vector<8xf32> to vector<8x1xf32>
    %92 = vector.broadcast %91 : vector<8x1xf32> to vector<8x8xf32>
    %93 = arith.divf %89, %92 : vector<8x8xf32>
    %cst_38 = arith.constant dense<0.000000e+00> : vector<8x8xf32>
    %94 = tpu.matmul %93, %83, %cst_38 {dimension_numbers = #tpu.dot_dimension_numbers<[1], [0], [0], [1], [0, 0, 1, 1], [], []>} : vector<8x8xf32>, vector<8x8xf32>, vector<8x8xf32> -> vector<8x8xf32>
    %c0_39 = arith.constant 0 : index
    %c24 = arith.constant 24 : index
    %95 = vector.load %arg16[%c0_39, %c24] : memref<16x32xf32, #tpu.memory_space<vmem>>, vector<8x8xf32>
    tpu.vector_store %arg16[%c0_39, %c24], %94 {strides = array<i32>} : memref<16x32xf32, #tpu.memory_space<vmem>>, vector<8x8xf32>,
    %96 = vector.extract_strided_slice %35 {offsets = [8, 0], sizes = [8, 8], strides = [1, 1]} : vector<16x96xf32> to vector<8x8xf32>
    %97 = vector.extract_strided_slice %35 {offsets = [8, 32], sizes = [8, 8], strides = [1, 1]} : vector<16x96xf32> to vector<8x8xf32>
    %98 = vector.extract_strided_slice %35 {offsets = [8, 64], sizes = [8, 8], strides = [1, 1]} : vector<16x96xf32> to vector<8x8xf32>
    %cst_40 = arith.constant dense<0.000000e+00> : vector<8x8xf32>
    %99 = tpu.matmul %96, %97, %cst_40 {dimension_numbers = #tpu.dot_dimension_numbers<[1], [1], [0], [0], [0, 0, 1, 0], [], []>} : vector<8x8xf32>, vector<8x8xf32>, vector<8x8xf32> -> vector<8x8xf32>
    %cst_41 = arith.constant dense<0xFF800000> : vector<8xf32>
    %100 = vector.multi_reduction <maximumf>, %99, %cst_41 [1] : vector<8x8xf32> to vector<8xf32>
    %101 = vector.shape_cast %100 : vector<8xf32> to vector<8x1xf32>
    %102 = vector.broadcast %101 : vector<8x1xf32> to vector<8x8xf32>
    %103 = arith.subf %99, %102 : vector<8x8xf32>
    %104 = math.exp %103 : vector<8x8xf32>
    %cst_42 = arith.constant dense<0.000000e+00> : vector<8xf32>
    %105 = vector.multi_reduction <add>, %104, %cst_42 [1] : vector<8x8xf32> to vector<8xf32>
    %106 = vector.shape_cast %105 : vector<8xf32> to vector<8x1xf32>
    %107 = vector.broadcast %106 : vector<8x1xf32> to vector<8x8xf32>
    %108 = arith.divf %104, %107 : vector<8x8xf32>
    %cst_43 = arith.constant dense<0.000000e+00> : vector<8x8xf32>
    %109 = tpu.matmul %108, %98, %cst_43 {dimension_numbers = #tpu.dot_dimension_numbers<[1], [0], [0], [1], [0, 0, 1, 1], [], []>} : vector<8x8xf32>, vector<8x8xf32>, vector<8x8xf32> -> vector<8x8xf32>
    %c8_44 = arith.constant 8 : index
    %c0_45 = arith.constant 0 : index
    %110 = vector.load %arg16[%c8_44, %c0_45] : memref<16x32xf32, #tpu.memory_space<vmem>>, vector<8x8xf32>
    tpu.vector_store %arg16[%c8_44, %c0_45], %109 {strides = array<i32>} : memref<16x32xf32, #tpu.memory_space<vmem>>, vector<8x8xf32>,
    %111 = vector.extract_strided_slice %35 {offsets = [8, 8], sizes = [8, 8], strides = [1, 1]} : vector<16x96xf32> to vector<8x8xf32>
    %112 = vector.extract_strided_slice %35 {offsets = [8, 40], sizes = [8, 8], strides = [1, 1]} : vector<16x96xf32> to vector<8x8xf32>
    %113 = vector.extract_strided_slice %35 {offsets = [8, 72], sizes = [8, 8], strides = [1, 1]} : vector<16x96xf32> to vector<8x8xf32>
    %cst_46 = arith.constant dense<0.000000e+00> : vector<8x8xf32>
    %114 = tpu.matmul %111, %112, %cst_46 {dimension_numbers = #tpu.dot_dimension_numbers<[1], [1], [0], [0], [0, 0, 1, 0], [], []>} : vector<8x8xf32>, vector<8x8xf32>, vector<8x8xf32> -> vector<8x8xf32>
    %cst_47 = arith.constant dense<0xFF800000> : vector<8xf32>
    %115 = vector.multi_reduction <maximumf>, %114, %cst_47 [1] : vector<8x8xf32> to vector<8xf32>
    %116 = vector.shape_cast %115 : vector<8xf32> to vector<8x1xf32>
    %117 = vector.broadcast %116 : vector<8x1xf32> to vector<8x8xf32>
    %118 = arith.subf %114, %117 : vector<8x8xf32>
    %119 = math.exp %118 : vector<8x8xf32>
    %cst_48 = arith.constant dense<0.000000e+00> : vector<8xf32>
    %120 = vector.multi_reduction <add>, %119, %cst_48 [1] : vector<8x8xf32> to vector<8xf32>
    %121 = vector.shape_cast %120 : vector<8xf32> to vector<8x1xf32>
    %122 = vector.broadcast %121 : vector<8x1xf32> to vector<8x8xf32>
    %123 = arith.divf %119, %122 : vector<8x8xf32>
    %cst_49 = arith.constant dense<0.000000e+00> : vector<8x8xf32>
    %124 = tpu.matmul %123, %113, %cst_49 {dimension_numbers = #tpu.dot_dimension_numbers<[1], [0], [0], [1], [0, 0, 1, 1], [], []>} : vector<8x8xf32>, vector<8x8xf32>, vector<8x8xf32> -> vector<8x8xf32>
    %c8_50 = arith.constant 8 : index
    %c8_51 = arith.constant 8 : index
    %125 = vector.load %arg16[%c8_50, %c8_51] : memref<16x32xf32, #tpu.memory_space<vmem>>, vector<8x8xf32>
    tpu.vector_store %arg16[%c8_50, %c8_51], %124 {strides = array<i32>} : memref<16x32xf32, #tpu.memory_space<vmem>>, vector<8x8xf32>,
    %126 = vector.extract_strided_slice %35 {offsets = [8, 16], sizes = [8, 8], strides = [1, 1]} : vector<16x96xf32> to vector<8x8xf32>
    %127 = vector.extract_strided_slice %35 {offsets = [8, 48], sizes = [8, 8], strides = [1, 1]} : vector<16x96xf32> to vector<8x8xf32>
    %128 = vector.extract_strided_slice %35 {offsets = [8, 80], sizes = [8, 8], strides = [1, 1]} : vector<16x96xf32> to vector<8x8xf32>
    %cst_52 = arith.constant dense<0.000000e+00> : vector<8x8xf32>
    %129 = tpu.matmul %126, %127, %cst_52 {dimension_numbers = #tpu.dot_dimension_numbers<[1], [1], [0], [0], [0, 0, 1, 0], [], []>} : vector<8x8xf32>, vector<8x8xf32>, vector<8x8xf32> -> vector<8x8xf32>
    %cst_53 = arith.constant dense<0xFF800000> : vector<8xf32>
    %130 = vector.multi_reduction <maximumf>, %129, %cst_53 [1] : vector<8x8xf32> to vector<8xf32>
    %131 = vector.shape_cast %130 : vector<8xf32> to vector<8x1xf32>
    %132 = vector.broadcast %131 : vector<8x1xf32> to vector<8x8xf32>
    %133 = arith.subf %129, %132 : vector<8x8xf32>
    %134 = math.exp %133 : vector<8x8xf32>
    %cst_54 = arith.constant dense<0.000000e+00> : vector<8xf32>
    %135 = vector.multi_reduction <add>, %134, %cst_54 [1] : vector<8x8xf32> to vector<8xf32>
    %136 = vector.shape_cast %135 : vector<8xf32> to vector<8x1xf32>
    %137 = vector.broadcast %136 : vector<8x1xf32> to vector<8x8xf32>
    %138 = arith.divf %134, %137 : vector<8x8xf32>
    %cst_55 = arith.constant dense<0.000000e+00> : vector<8x8xf32>
    %139 = tpu.matmul %138, %128, %cst_55 {dimension_numbers = #tpu.dot_dimension_numbers<[1], [0], [0], [1], [0, 0, 1, 1], [], []>} : vector<8x8xf32>, vector<8x8xf32>, vector<8x8xf32> -> vector<8x8xf32>
    %c8_56 = arith.constant 8 : index
    %c16_57 = arith.constant 16 : index
    %140 = vector.load %arg16[%c8_56, %c16_57] : memref<16x32xf32, #tpu.memory_space<vmem>>, vector<8x8xf32>
    tpu.vector_store %arg16[%c8_56, %c16_57], %139 {strides = array<i32>} : memref<16x32xf32, #tpu.memory_space<vmem>>, vector<8x8xf32>,
    %141 = vector.extract_strided_slice %35 {offsets = [8, 24], sizes = [8, 8], strides = [1, 1]} : vector<16x96xf32> to vector<8x8xf32>
    %142 = vector.extract_strided_slice %35 {offsets = [8, 56], sizes = [8, 8], strides = [1, 1]} : vector<16x96xf32> to vector<8x8xf32>
    %143 = vector.extract_strided_slice %35 {offsets = [8, 88], sizes = [8, 8], strides = [1, 1]} : vector<16x96xf32> to vector<8x8xf32>
    %cst_58 = arith.constant dense<0.000000e+00> : vector<8x8xf32>
    %144 = tpu.matmul %141, %142, %cst_58 {dimension_numbers = #tpu.dot_dimension_numbers<[1], [1], [0], [0], [0, 0, 1, 0], [], []>} : vector<8x8xf32>, vector<8x8xf32>, vector<8x8xf32> -> vector<8x8xf32>
    %cst_59 = arith.constant dense<0xFF800000> : vector<8xf32>
    %145 = vector.multi_reduction <maximumf>, %144, %cst_59 [1] : vector<8x8xf32> to vector<8xf32>
    %146 = vector.shape_cast %145 : vector<8xf32> to vector<8x1xf32>
    %147 = vector.broadcast %146 : vector<8x1xf32> to vector<8x8xf32>
    %148 = arith.subf %144, %147 : vector<8x8xf32>
    %149 = math.exp %148 : vector<8x8xf32>
    %cst_60 = arith.constant dense<0.000000e+00> : vector<8xf32>
    %150 = vector.multi_reduction <add>, %149, %cst_60 [1] : vector<8x8xf32> to vector<8xf32>
    %151 = vector.shape_cast %150 : vector<8xf32> to vector<8x1xf32>
    %152 = vector.broadcast %151 : vector<8x1xf32> to vector<8x8xf32>
    %153 = arith.divf %149, %152 : vector<8x8xf32>
    %cst_61 = arith.constant dense<0.000000e+00> : vector<8x8xf32>
    %154 = tpu.matmul %153, %143, %cst_61 {dimension_numbers = #tpu.dot_dimension_numbers<[1], [0], [0], [1], [0, 0, 1, 1], [], []>} : vector<8x8xf32>, vector<8x8xf32>, vector<8x8xf32> -> vector<8x8xf32>
    %c8_62 = arith.constant 8 : index
    %c24_63 = arith.constant 24 : index
    %155 = vector.load %arg16[%c8_62, %c24_63] : memref<16x32xf32, #tpu.memory_space<vmem>>, vector<8x8xf32>
    tpu.vector_store %arg16[%c8_62, %c24_63], %154 {strides = array<i32>} : memref<16x32xf32, #tpu.memory_space<vmem>>, vector<8x8xf32>,
    %c0_64 = arith.constant 0 : index
    %c0_65 = arith.constant 0 : index
    %156 = vector.load %arg16[%c0_64, %c0_65] : memref<16x32xf32, #tpu.memory_space<vmem>>, vector<16x32xf32>
    %157 = arith.truncf %156 : vector<16x32xf32> to vector<16x32xbf16>
    %c0_66 = arith.constant 0 : index
    %c0_67 = arith.constant 0 : index
    %c0_68 = arith.constant 0 : index
    %158 = vector.load %arg6[%c0_66, %c0_67, %c0_68] : memref<1x32x32xbf16, #tpu.memory_space<vmem>>, vector<1x32x32xbf16>
    %159 = vector.shape_cast %158 : vector<1x32x32xbf16> to vector<32x32xbf16>
    %cst_69 = arith.constant dense<0.000000e+00> : vector<16x32xf32>
    %160 = tpu.matmul %157, %159, %cst_69 {dimension_numbers = #tpu.dot_dimension_numbers<[1], [0], [0], [1], [0, 0, 1, 1], [], []>} : vector<16x32xbf16>, vector<32x32xbf16>, vector<16x32xf32> -> vector<16x32xf32>
    %c0_70 = arith.constant 0 : index
    %c0_71 = arith.constant 0 : index
    %c0_72 = arith.constant 0 : index
    %161 = vector.load %arg7[%c0_70, %c0_71, %c0_72] : memref<1x1x32xf32, #tpu.memory_space<vmem>>, vector<1x1x32xf32>
    %162 = vector.shape_cast %161 : vector<1x1x32xf32> to vector<1x32xf32>
    %163 = vector.broadcast %162 : vector<1x32xf32> to vector<16x32xf32>
    %164 = arith.addf %160, %163 : vector<16x32xf32>
    %165 = arith.addf %3, %164 : vector<16x32xf32>
    %c0_73 = arith.constant 0 : index
    %c0_74 = arith.constant 0 : index
    %c0_75 = arith.constant 0 : index
    %166 = vector.load %arg8[%c0_73, %c0_74, %c0_75] : memref<1x1x32xf32, #tpu.memory_space<vmem>>, vector<1x1x32xf32>
    %167 = vector.shape_cast %166 : vector<1x1x32xf32> to vector<1x32xf32>
    %c0_76 = arith.constant 0 : index
    %c0_77 = arith.constant 0 : index
    %c0_78 = arith.constant 0 : index
    %168 = vector.load %arg9[%c0_76, %c0_77, %c0_78] : memref<1x1x32xf32, #tpu.memory_space<vmem>>, vector<1x1x32xf32>
    %169 = vector.shape_cast %168 : vector<1x1x32xf32> to vector<1x32xf32>
    %cst_79 = arith.constant dense<0.000000e+00> : vector<16xf32>
    %170 = vector.multi_reduction <add>, %165, %cst_79 [1] : vector<16x32xf32> to vector<16xf32>
    %171 = vector.shape_cast %170 : vector<16xf32> to vector<16x1xf32>
    %cst_80 = arith.constant 3.200000e+01 : f32
    %172 = vector.broadcast %cst_80 : f32 to vector<16x1xf32>
    %173 = arith.divf %171, %172 : vector<16x1xf32>
    %174 = vector.broadcast %173 : vector<16x1xf32> to vector<16x32xf32>
    %175 = arith.subf %165, %174 : vector<16x32xf32>
    %176 = arith.mulf %175, %175 : vector<16x32xf32>
    %cst_81 = arith.constant dense<0.000000e+00> : vector<16xf32>
    %177 = vector.multi_reduction <add>, %176, %cst_81 [1] : vector<16x32xf32> to vector<16xf32>
    %178 = vector.shape_cast %177 : vector<16xf32> to vector<16x1xf32>
    %cst_82 = arith.constant 0.0322580636 : f32
    %179 = vector.broadcast %cst_82 : f32 to vector<16x1xf32>
    %180 = arith.mulf %178, %179 : vector<16x1xf32>
    %181 = math.sqrt %180 : vector<16x1xf32>
    %cst_83 = arith.constant 9.99999997E-7 : f32
    %182 = vector.broadcast %cst_83 : f32 to vector<16x1xf32>
    %183 = arith.addf %181, %182 : vector<16x1xf32>
    %184 = vector.broadcast %183 : vector<16x1xf32> to vector<16x32xf32>
    %185 = arith.divf %175, %184 : vector<16x32xf32>
    %186 = vector.broadcast %167 : vector<1x32xf32> to vector<16x32xf32>
    %187 = arith.mulf %185, %186 : vector<16x32xf32>
    %188 = vector.broadcast %169 : vector<1x32xf32> to vector<16x32xf32>
    %189 = arith.addf %187, %188 : vector<16x32xf32>
    %190 = arith.truncf %189 : vector<16x32xf32> to vector<16x32xbf16>
    %c0_84 = arith.constant 0 : index
    %c0_85 = arith.constant 0 : index
    %c0_86 = arith.constant 0 : index
    %191 = vector.load %arg10[%c0_84, %c0_85, %c0_86] : memref<1x32x128xbf16, #tpu.memory_space<vmem>>, vector<1x32x128xbf16>
    %192 = vector.shape_cast %191 : vector<1x32x128xbf16> to vector<32x128xbf16>
    %cst_87 = arith.constant dense<0.000000e+00> : vector<16x128xf32>
    %193 = tpu.matmul %190, %192, %cst_87 {dimension_numbers = #tpu.dot_dimension_numbers<[1], [0], [0], [1], [0, 0, 1, 1], [], []>} : vector<16x32xbf16>, vector<32x128xbf16>, vector<16x128xf32> -> vector<16x128xf32>
    %c0_88 = arith.constant 0 : index
    %c0_89 = arith.constant 0 : index
    %c0_90 = arith.constant 0 : index
    %194 = vector.load %arg11[%c0_88, %c0_89, %c0_90] : memref<1x1x128xf32, #tpu.memory_space<vmem>>, vector<1x1x128xf32>
    %195 = vector.shape_cast %194 : vector<1x1x128xf32> to vector<1x128xf32>
    %196 = vector.broadcast %195 : vector<1x128xf32> to vector<16x128xf32>
    %197 = arith.addf %193, %196 : vector<16x128xf32>
    %cst_91 = arith.constant 5.000000e-01 : f32
    %198 = vector.broadcast %cst_91 : f32 to vector<16x128xf32>
    %199 = arith.mulf %198, %197 : vector<16x128xf32>
    %cst_92 = arith.constant 4.471500e-02 : f32
    %200 = vector.broadcast %cst_92 : f32 to vector<16x128xf32>
    %201 = arith.mulf %200, %197 : vector<16x128xf32>
    %202 = arith.mulf %201, %197 : vector<16x128xf32>
    %203 = arith.mulf %202, %197 : vector<16x128xf32>
    %204 = arith.addf %197, %203 : vector<16x128xf32>
    %cst_93 = arith.constant 0.797884583 : f32
    %205 = vector.broadcast %cst_93 : f32 to vector<16x128xf32>
    %206 = arith.mulf %205, %204 : vector<16x128xf32>
    %207 = math.tanh %206 : vector<16x128xf32>
    %cst_94 = arith.constant 1.000000e+00 : f32
    %208 = vector.broadcast %cst_94 : f32 to vector<16x128xf32>
    %209 = arith.addf %208, %207 : vector<16x128xf32>
    %210 = arith.mulf %199, %209 : vector<16x128xf32>
    %211 = arith.truncf %210 : vector<16x128xf32> to vector<16x128xbf16>
    %c0_95 = arith.constant 0 : index
    %c0_96 = arith.constant 0 : index
    %c0_97 = arith.constant 0 : index
    %212 = vector.load %arg12[%c0_95, %c0_96, %c0_97] : memref<1x128x32xbf16, #tpu.memory_space<vmem>>, vector<1x128x32xbf16>
    %213 = vector.shape_cast %212 : vector<1x128x32xbf16> to vector<128x32xbf16>
    %cst_98 = arith.constant dense<0.000000e+00> : vector<16x32xf32>
    %214 = tpu.matmul %211, %213, %cst_98 {dimension_numbers = #tpu.dot_dimension_numbers<[1], [0], [0], [1], [0, 0, 1, 1], [], []>} : vector<16x128xbf16>, vector<128x32xbf16>, vector<16x32xf32> -> vector<16x32xf32>
    %c0_99 = arith.constant 0 : index
    %c0_100 = arith.constant 0 : index
    %c0_101 = arith.constant 0 : index
    %215 = vector.load %arg13[%c0_99, %c0_100, %c0_101] : memref<1x1x32xf32, #tpu.memory_space<vmem>>, vector<1x1x32xf32>
    %216 = vector.shape_cast %215 : vector<1x1x32xf32> to vector<1x32xf32>
    %217 = vector.broadcast %216 : vector<1x32xf32> to vector<16x32xf32>
    %218 = arith.addf %214, %217 : vector<16x32xf32>
    %219 = arith.addf %165, %218 : vector<16x32xf32>
    %c0_102 = arith.constant 0 : index
    %c0_103 = arith.constant 0 : index
    %220 = vector.load %arg15[%c0_102, %c0_103] : memref<16x32xf32, #tpu.memory_space<vmem>>, vector<16x32xf32>
    tpu.vector_store %arg15[%c0_102, %c0_103], %219 {strides = array<i32>} : memref<16x32xf32, #tpu.memory_space<vmem>>, vector<16x32xf32>,
    %c0_i32_104 = arith.constant 0 : i32
    %221 = arith.cmpi eq, %arg0, %c0_i32_104 : i32
    %222 = arith.extui %221 : i1 to i32
    %c0_i32_105 = arith.constant 0 : i32
    %223 = arith.cmpi ne, %222, %c0_i32_105 : i32
    scf.if %223 {
      %c0_106 = arith.constant 0 : index
      %c0_107 = arith.constant 0 : index
      %224 = vector.load %arg14[%c0_106, %c0_107] : memref<16x32xf32, #tpu.memory_space<vmem>>, vector<16x32xf32>
      tpu.vector_store %arg14[%c0_106, %c0_107], %219 {strides = array<i32>} : memref<16x32xf32, #tpu.memory_space<vmem>>, vector<16x32xf32>,
    } else {
    }
    return
  }
  func.func @transform_0(%arg0: i32) -> (i32, i32) {
    %c0_i32 = arith.constant 0 : i32
    %c0_i32_0 = arith.constant 0 : i32
    %c0_i32_1 = arith.constant 0 : i32
    return %c0_i32, %c0_i32_0 : i32, i32
  }
  func.func @transform_1(%arg0: i32) -> (i32, i32, i32) {
    %c0_i32 = arith.constant 0 : i32
    %c0_i32_0 = arith.constant 0 : i32
    %c0_i32_1 = arith.constant 0 : i32
    return %arg0, %c0_i32, %c0_i32_0 : i32, i32, i32
  }
  func.func @transform_2(%arg0: i32) -> (i32, i32, i32) {
    %c0_i32 = arith.constant 0 : i32
    %c0_i32_0 = arith.constant 0 : i32
    %c0_i32_1 = arith.constant 0 : i32
    return %arg0, %c0_i32, %c0_i32_0 : i32, i32, i32
  }
  func.func @transform_3(%arg0: i32) -> (i32, i32, i32) {
    %c0_i32 = arith.constant 0 : i32
    %c0_i32_0 = arith.constant 0 : i32
    %c0_i32_1 = arith.constant 0 : i32
    return %arg0, %c0_i32, %c0_i32_0 : i32, i32, i32
  }
  func.func @transform_4(%arg0: i32) -> (i32, i32, i32) {
    %c0_i32 = arith.constant 0 : i32
    %c0_i32_0 = arith.constant 0 : i32
    %c0_i32_1 = arith.constant 0 : i32
    return %arg0, %c0_i32, %c0_i32_0 : i32, i32, i32
  }
  func.func @transform_5(%arg0: i32) -> (i32, i32, i32) {
    %c0_i32 = arith.constant 0 : i32
    %c0_i32_0 = arith.constant 0 : i32
    %c0_i32_1 = arith.constant 0 : i32
    return %arg0, %c0_i32, %c0_i32_0 : i32, i32, i32
  }
  func.func @transform_6(%arg0: i32) -> (i32, i32, i32) {
    %c0_i32 = arith.constant 0 : i32
    %c0_i32_0 = arith.constant 0 : i32
    %c0_i32_1 = arith.constant 0 : i32
    return %arg0, %c0_i32, %c0_i32_0 : i32, i32, i32
  }
  func.func @transform_7(%arg0: i32) -> (i32, i32, i32) {
    %c0_i32 = arith.constant 0 : i32
    %c0_i32_0 = arith.constant 0 : i32
    %c0_i32_1 = arith.constant 0 : i32
    return %arg0, %c0_i32, %c0_i32_0 : i32, i32, i32
  }
  func.func @transform_8(%arg0: i32) -> (i32, i32, i32) {
    %c0_i32 = arith.constant 0 : i32
    %c0_i32_0 = arith.constant 0 : i32
    %c0_i32_1 = arith.constant 0 : i32
    return %arg0, %c0_i32, %c0_i32_0 : i32, i32, i32
  }
  func.func @transform_9(%arg0: i32) -> (i32, i32, i32) {
    %c0_i32 = arith.constant 0 : i32
    %c0_i32_0 = arith.constant 0 : i32
    %c0_i32_1 = arith.constant 0 : i32
    return %arg0, %c0_i32, %c0_i32_0 : i32, i32, i32
  }
  func.func @transform_10(%arg0: i32) -> (i32, i32, i32) {
    %c0_i32 = arith.constant 0 : i32
    %c0_i32_0 = arith.constant 0 : i32
    %c0_i32_1 = arith.constant 0 : i32
    return %arg0, %c0_i32, %c0_i32_0 : i32, i32, i32
  }
  func.func @transform_11(%arg0: i32) -> (i32, i32, i32) {
    %c0_i32 = arith.constant 0 : i32
    %c0_i32_0 = arith.constant 0 : i32
    %c0_i32_1 = arith.constant 0 : i32
    return %arg0, %c0_i32, %c0_i32_0 : i32, i32, i32
  }
  func.func @transform_12(%arg0: i32) -> (i32, i32, i32) {
    %c0_i32 = arith.constant 0 : i32
    %c0_i32_0 = arith.constant 0 : i32
    %c0_i32_1 = arith.constant 0 : i32
    return %arg0, %c0_i32, %c0_i32_0 : i32, i32, i32
  }
  func.func @transform_13(%arg0: i32) -> (i32, i32) {
    %c0_i32 = arith.constant 0 : i32
    %c0_i32_0 = arith.constant 0 : i32
    %c0_i32_1 = arith.constant 0 : i32
    return %c0_i32, %c0_i32_0 : i32, i32
  }
}

</mosaic_0001>

<llo_original>
// kernel: bert_forward_pallas.1
$region0: #{bert_forward_pallas.1}
  #allocation0 [shape = 'u32[]', space=smem, size = 0x4, offset = 0x4, fixed_abs, tag = 'smem constant byte address 0x4 - core index']
  #allocation1 [shape = 'u32[144,128]{1,0:T(1,128)}', space=vmem, size = 0x12000, scoped, tag = 'internal scratch']
  #allocation2 [shape = 'f32[16,32]{1,0:T(8,128)}', space=vmem, size = 0x2000, scoped, tag = 'scratch operand']
  #allocation3 [shape = 'f32[16,32]{1,0:T(8,128)}', space=vmem, size = 0x2000, scoped, tag = 'scratch operand']
  %s0 = inlined_call_operand.vmem [shape: f32[16,32], index: 0, kind: input, shape index: {}]
  %s1 = inlined_call_operand.vmem [shape: f32[1,1,32], index: 1, kind: input, shape index: {}]
  %s2 = inlined_call_operand.vmem [shape: f32[1,1,32], index: 2, kind: input, shape index: {}]
  %s3 = inlined_call_operand.vmem [shape: bf16[1,32,96], index: 3, kind: input, shape index: {}]
  %s4 = inlined_call_operand.vmem [shape: f32[1,1,96], index: 4, kind: input, shape index: {}]
  %s5 = inlined_call_operand.vmem [shape: bf16[1,32,32], index: 5, kind: input, shape index: {}]
  %s6 = inlined_call_operand.vmem [shape: f32[1,1,32], index: 6, kind: input, shape index: {}]
  %s7 = inlined_call_operand.vmem [shape: f32[1,1,32], index: 7, kind: input, shape index: {}]
  %s8 = inlined_call_operand.vmem [shape: f32[1,1,32], index: 8, kind: input, shape index: {}]
  %s9 = inlined_call_operand.vmem [shape: bf16[1,32,128], index: 9, kind: input, shape index: {}]
  %s10 = inlined_call_operand.vmem [shape: f32[1,1,128], index: 10, kind: input, shape index: {}]
  %s11 = inlined_call_operand.vmem [shape: bf16[1,128,32], index: 11, kind: input, shape index: {}]
  %s12 = inlined_call_operand.vmem [shape: f32[1,1,32], index: 12, kind: input, shape index: {}]
  %s13 = inlined_call_operand.hbm [shape: f32[16,32], index: 13, kind: output, shape index: {}]
  %s14 = sld [smem:[#allocation0]]
  $region70: #{bert_forward_pallas.1} parent=0
    _
  %s16 = ssub.s32 1, %s14
  %s17 = scalar_select 0, %s16, %s14
  $region1: #{bert_forward_pallas.1} parent=0
    #allocation4 [shape = 'u8[8192]{0}', space=vmem, size = 0x2000, scoped, tag = 'output window, operand 0, single buffered']
    #allocation5 [shape = 's32[1]{0}', space=sflag, size = 0x4, scoped, tag = 'scoped memory for bert_forward_pallas.1']
    %18 = vsyncpa [#allocation5], 0
    // Predicated region
    $region2: #{bert_forward_pallas.1} parent=1 // pred_check
      _
    $region3: #{bert_forward_pallas.1} parent=1 // pred_check_branch
      %20 = sbr.rel (0) target = $region5
    $region4: #{bert_forward_pallas.1} parent=1 // pred_region
      _
    $region5: #{bert_forward_pallas.1} parent=1 // pred_fallthru
      _
    // Predicated region
    $region6: #{bert_forward_pallas.1} parent=1 // pred_check
      _
    $region7: #{bert_forward_pallas.1} parent=1 // pred_check_branch
      %22 = sbr.rel (0) target = $region9
    $region8: #{bert_forward_pallas.1} parent=1 // pred_region
      _
    $region9: #{bert_forward_pallas.1} parent=1 // pred_fallthru
      _
    // Predicated region
    $region10: #{bert_forward_pallas.1} parent=1 // pred_check
      _
    $region11: #{bert_forward_pallas.1} parent=1 // pred_check_branch
      %24 = sbr.rel (0) target = $region13
    $region12: #{bert_forward_pallas.1} parent=1 // pred_region
      _
    $region13: #{bert_forward_pallas.1} parent=1 // pred_fallthru
      _
    // Predicated region
    $region14: #{bert_forward_pallas.1} parent=1 // pred_check
      _
    $region15: #{bert_forward_pallas.1} parent=1 // pred_check_branch
      %26 = sbr.rel (0) target = $region17
    $region16: #{bert_forward_pallas.1} parent=1 // pred_region
      _
    $region17: #{bert_forward_pallas.1} parent=1 // pred_fallthru
      _
    // Predicated region
    $region18: #{bert_forward_pallas.1} parent=1 // pred_check
      _
    $region19: #{bert_forward_pallas.1} parent=1 // pred_check_branch
      %28 = sbr.rel (0) target = $region21
    $region20: #{bert_forward_pallas.1} parent=1 // pred_region
      _
    $region21: #{bert_forward_pallas.1} parent=1 // pred_fallthru
      _
    // Predicated region
    $region22: #{bert_forward_pallas.1} parent=1 // pred_check
      _
    $region23: #{bert_forward_pallas.1} parent=1 // pred_check_branch
      %30 = sbr.rel (0) target = $region25
    $region24: #{bert_forward_pallas.1} parent=1 // pred_region
      _
    $region25: #{bert_forward_pallas.1} parent=1 // pred_fallthru
      _
    // Predicated region
    $region26: #{bert_forward_pallas.1} parent=1 // pred_check
      _
    $region27: #{bert_forward_pallas.1} parent=1 // pred_check_branch
      %32 = sbr.rel (0) target = $region29
    $region28: #{bert_forward_pallas.1} parent=1 // pred_region
      _
    $region29: #{bert_forward_pallas.1} parent=1 // pred_fallthru
      _
    // Predicated region
    $region30: #{bert_forward_pallas.1} parent=1 // pred_check
      _
    $region31: #{bert_forward_pallas.1} parent=1 // pred_check_branch
      %34 = sbr.rel (0) target = $region33
    $region32: #{bert_forward_pallas.1} parent=1 // pred_region
      _
    $region33: #{bert_forward_pallas.1} parent=1 // pred_fallthru
      _
    // Predicated region
    $region34: #{bert_forward_pallas.1} parent=1 // pred_check
      _
    $region35: #{bert_forward_pallas.1} parent=1 // pred_check_branch
      %36 = sbr.rel (0) target = $region37
    $region36: #{bert_forward_pallas.1} parent=1 // pred_region
      _
    $region37: #{bert_forward_pallas.1} parent=1 // pred_fallthru
      _
    // Predicated region
    $region38: #{bert_forward_pallas.1} parent=1 // pred_check
      _
    $region39: #{bert_forward_pallas.1} parent=1 // pred_check_branch
      %38 = sbr.rel (0) target = $region41
    $region40: #{bert_forward_pallas.1} parent=1 // pred_region
      _
    $region41: #{bert_forward_pallas.1} parent=1 // pred_fallthru
      _
    // Predicated region
    $region42: #{bert_forward_pallas.1} parent=1 // pred_check
      _
    $region43: #{bert_forward_pallas.1} parent=1 // pred_check_branch
      %40 = sbr.rel (0) target = $region45
    $region44: #{bert_forward_pallas.1} parent=1 // pred_region
      _
    $region45: #{bert_forward_pallas.1} parent=1 // pred_fallthru
      _
    // Predicated region
    $region46: #{bert_forward_pallas.1} parent=1 // pred_check
      _
    $region47: #{bert_forward_pallas.1} parent=1 // pred_check_branch
      %42 = sbr.rel (0) target = $region49
    $region48: #{bert_forward_pallas.1} parent=1 // pred_region
      _
    $region49: #{bert_forward_pallas.1} parent=1 // pred_fallthru
      _
    // Predicated region
    $region50: #{bert_forward_pallas.1} parent=1 // pred_check
      _
    $region51: #{bert_forward_pallas.1} parent=1 // pred_check_branch
      %44 = sbr.rel (0) target = $region53
    $region52: #{bert_forward_pallas.1} parent=1 // pred_region
      _
    $region53: #{bert_forward_pallas.1} parent=1 // pred_fallthru
      _
    %p46 = scmp.eq.s32.totalorder 0, 0
    // Predicated region
    $region54: #{bert_forward_pallas.1} parent=1 // pred_check
      %p47 = pneg %p46
    $region55: #{bert_forward_pallas.1} parent=1 // pred_check_branch
      %49 = sbr.rel (%p47) target = $region57
    $region56: #{bert_forward_pallas.1} parent=1 // pred_region
      %v50 = vld [vmem:[%s0] sm:$0xff]
      %v51 = vld [vmem:[%s0 + $0x8] sm:$0xff]
      %vm52 = vcmask 261120
      %53 = vst.msk [vmem:[#allocation2] sm:$0xff] %vm52, %v50
      %54 = vst.msk [vmem:[#allocation2 + $0x8] sm:$0xff] %vm52, %v51
    $region57: #{bert_forward_pallas.1} parent=1 // pred_fallthru
      _
    %v55 = vld [vmem:[#allocation2] sm:$0xff]
    %v56 = vld [vmem:[#allocation2 + $0x8] sm:$0xff]
    %v57 = vld [vmem:[%s1] sm:$0x1]
    %v58 = vld [vmem:[%s2] sm:$0x1]
    %vm59 = vcmask 261120
    %v60 = vsel %vm59, %v55, 0.0
    %61 = vadd.xlane.f32.xlu0 %v60
    %v62 = vpop.xlane.xlu0 %61
    %v63 = vsel %vm59, %v56, 0.0
    %64 = vadd.xlane.f32.xlu0 %v63
    %v65 = vpop.xlane.xlu0 %64
    %v66 = vrcp.pop 32.0
    %v67 = vmul.f32 %v62, %v66
    %v68 = vmul.f32 %v65, %v66
    %v69 = vsub.f32 %v55, %v67
    %v70 = vsub.f32 %v56, %v68
    %v71 = vmul.f32 %v69, %v69
    %v72 = vmul.f32 %v70, %v70
    %v73 = vsel %vm59, %v71, 0.0
    %74 = vadd.xlane.f32.xlu0 %v73
    %v75 = vpop.xlane.xlu0 %74
    %v76 = vsel %vm59, %v72, 0.0
    %77 = vadd.xlane.f32.xlu0 %v76
    %v78 = vpop.xlane.xlu0 %77
    %v79 = vmul.f32 %v75, 0.032258064
    %v80 = vmul.f32 %v78, 0.032258064
    %v81 = vrsqrt.pop %v79
    %v82 = vmul.f32 %v79, %v81
    %vm83 = vcmp.eq.f32.partialorder %v79, inf
    %v84 = vsel %vm83, %v79, %v82
    %vm85 = vcmp.eq.f32.partialorder %v79, 0.0
    %v86 = vand.u32 %v79, 2147483648
    %v87 = vsel %vm85, %v86, %v84
    %v88 = vrsqrt.pop %v80
    %v89 = vmul.f32 %v80, %v88
    %vm90 = vcmp.eq.f32.partialorder %v80, inf
    %v91 = vsel %vm90, %v80, %v89
    %vm92 = vcmp.eq.f32.partialorder %v80, 0.0
    %v93 = vand.u32 %v80, 2147483648
    %v94 = vsel %vm92, %v93, %v91
    %v95 = vadd.f32 %v87, 1e-06
    %v96 = vadd.f32 %v94, 1e-06
    %v97 = vrcp.pop %v95
    %v98 = vmul.f32 %v69, %v97
    %v99 = vrcp.pop %v96
    %v100 = vmul.f32 %v70, %v99
    %v102 = vlaneseq
    %v103 = vshrl.u32 %v102, 7
    %v104 = vsub.s32 0, %v103
    %v105 = vrot.slane %v57, %v104
    %v107 = vmul.f32 %v98, %v105
    %v108 = vmul.f32 %v100, %v105
    %v110 = vlaneseq
    %v111 = vshrl.u32 %v110, 7
    %v112 = vsub.s32 0, %v111
    %v113 = vrot.slane %v58, %v112
    %v115 = vadd.f32 %v107, %v113
    %v116 = vadd.f32 %v108, %v113
    %v117 = vpack.c.bf16 %v116, %v115
    %v118 = vld [vmem:[%s3] sm:$0xf]
    %v119 = vld [vmem:[%s3 + $0x4] sm:$0xf]
    %v120 = vld [vmem:[%s3 + $0x8] sm:$0xf]
    %v121 = vld [vmem:[%s3 + $0xc] sm:$0xf]
    %v122 = vld [vmem:[%s4] sm:$0x1]
    %v124 = vlaneseq
    %v125 = vshrl.u32 %v124, 7
    %v126 = vsub.s32 0, %v125
    %v127 = vrot.slane %v122, %v126
    %v133 = vunpack.c.l.b16 %v118
    %v134 = vunpack.c.l.b16 %v119
    %v135 = vunpack.c.l.b16 %v120
    %v136 = vunpack.c.l.b16 %v121
    %v137 = vpack.c.b16 %v134, %v133
    %v138 = vpack.c.b16 %v136, %v135
    %v142 = vsel %vm59, %v117, 0
    %144 = vmatprep.subr.bf16.mxu0 0
    %145 = vmatpush1.bf16.msra.mxu0 %v137
    %146 = vmatprep.subr.bf16.mxu0 0
    %147 = vmatpush1.bf16.msra.mxu0 %v138
    %148 = vmatprep.subr.bf16.mxu0 0
    %149 = vmatpush1.bf16.msra.mxu0 0
    %150 = vmatprep.subr.bf16.mxu0 0
    %151 = vmatpush1.bf16.msra.mxu0 0
    %152 = vmatprep.subr.bf16.mxu0 0
    %153 = vmatpush1.bf16.msra.mxu0 0
    %154 = vmatprep.subr.bf16.mxu0 0
    %155 = vmatpush1.bf16.msra.mxu0 0
    %156 = vmatprep.subr.bf16.mxu0 0
    %157 = vmatpush1.bf16.msra.mxu0 0
    %158 = vmatprep.subr.bf16.mxu0 0
    %159 = vmatpush1.bf16.msra.mxu0 0
    %160 = vmatprep.subr.bf16.mxu0 0
    %161 = vmatpush1.bf16.msra.mxu0 0
    %162 = vmatprep.subr.bf16.mxu0 0
    %163 = vmatpush1.bf16.msra.mxu0 0
    %164 = vmatprep.subr.bf16.mxu0 0
    %165 = vmatpush1.bf16.msra.mxu0 0
    %166 = vmatprep.subr.bf16.mxu0 0
    %167 = vmatpush1.bf16.msra.mxu0 0
    %168 = vmatprep.subr.bf16.mxu0 0
    %169 = vmatpush1.bf16.msra.mxu0 0
    %170 = vmatprep.subr.bf16.mxu0 0
    %171 = vmatpush1.bf16.msra.mxu0 0
    %172 = vmatprep.subr.bf16.mxu0 0
    %173 = vmatpush1.bf16.msra.mxu0 0
    %174 = vmatprep.subr.bf16.mxu0 0
    %175 = vmatpush1.bf16.msra.mxu0 0
    %176 = vmatprep.mubr.bf16.mxu0 0
    %177 = vmatmul.mubr.bf16.gmra.mrb[0].mxu0 %v142
    %v178 = vpop.f32.mrb[0].mxu0
    %v179 = vadd.f32 %v127, %v178
    %v180 = vpop.f32.mrb[0].mxu0
    %v181 = vpop.f32.mrb[0].mxu0
    %v182 = vadd.f32 %v127, %v181
    %v183 = vpop.f32.mrb[0].mxu0
    %184 = vdwg.mxu0
    %186 = vrot.lane.b32.xlu0 %v179, 96
    %v187 = vpop.permute.xlu0 %186
    %vm188 = vcmask 64512
    %v189 = vsel %vm188, %v179, 0
    %v191 = vsel %vm188, %v187, 0
    %193 = vmatprep.subr.mxu0 0.0
    %194 = vmatpush1.xpose.msra.mxu0 %v191
    %195 = vmatprep.subr.mxu0 0.0
    %196 = vmatpush1.xpose.msra.mxu0 0.0
    %197 = vmatprep.subr.mxu0 0.0
    %198 = vmatpush1.xpose.msra.mxu0 0.0
    %199 = vmatprep.subr.mxu0 0.0
    %200 = vmatpush1.xpose.msra.mxu0 0.0
    %201 = vmatprep.subr.mxu0 0.0
    %202 = vmatpush1.xpose.msra.mxu0 0.0
    %203 = vmatprep.subr.mxu0 0.0
    %204 = vmatpush1.xpose.msra.mxu0 0.0
    %205 = vmatprep.subr.mxu0 0.0
    %206 = vmatpush1.xpose.msra.mxu0 0.0
    %207 = vmatprep.subr.mxu0 0.0
    %208 = vmatpush1.xpose.msra.mxu0 0.0
    %209 = vmatprep.subr.mxu0 0.0
    %210 = vmatpush1.xpose.msra.mxu0 0.0
    %211 = vmatprep.subr.mxu0 0.0
    %212 = vmatpush1.xpose.msra.mxu0 0.0
    %213 = vmatprep.subr.mxu0 0.0
    %214 = vmatpush1.xpose.msra.mxu0 0.0
    %215 = vmatprep.subr.mxu0 0.0
    %216 = vmatpush1.xpose.msra.mxu0 0.0
    %217 = vmatprep.subr.mxu0 0.0
    %218 = vmatpush1.xpose.msra.mxu0 0.0
    %219 = vmatprep.subr.mxu0 0.0
    %220 = vmatpush1.xpose.msra.mxu0 0.0
    %221 = vmatprep.subr.mxu0 0.0
    %222 = vmatpush1.xpose.msra.mxu0 0.0
    %223 = vmatprep.subr.mxu0 0.0
    %224 = vmatpush1.xpose.msra.mxu0 0.0
    %225 = vmatprep.subr.mxu0 0.0
    %226 = vmatpush1.xpose.msra.mxu0 0.0
    %227 = vmatprep.subr.mxu0 0.0
    %228 = vmatpush1.xpose.msra.mxu0 0.0
    %229 = vmatprep.subr.mxu0 0.0
    %230 = vmatpush1.xpose.msra.mxu0 0.0
    %231 = vmatprep.subr.mxu0 0.0
    %232 = vmatpush1.xpose.msra.mxu0 0.0
    %233 = vmatprep.subr.mxu0 0.0
    %234 = vmatpush1.xpose.msra.mxu0 0.0
    %235 = vmatprep.subr.mxu0 0.0
    %236 = vmatpush1.xpose.msra.mxu0 0.0
    %237 = vmatprep.subr.mxu0 0.0
    %238 = vmatpush1.xpose.msra.mxu0 0.0
    %239 = vmatprep.subr.mxu0 0.0
    %240 = vmatpush1.xpose.msra.mxu0 0.0
    %241 = vmatprep.subr.mxu0 0.0
    %242 = vmatpush1.xpose.msra.mxu0 0.0
    %243 = vmatprep.subr.mxu0 0.0
    %244 = vmatpush1.xpose.msra.mxu0 0.0
    %245 = vmatprep.subr.mxu0 0.0
    %246 = vmatpush1.xpose.msra.mxu0 0.0
    %247 = vmatprep.subr.mxu0 0.0
    %248 = vmatpush1.xpose.msra.mxu0 0.0
    %249 = vmatprep.subr.mxu0 0.0
    %250 = vmatpush1.xpose.msra.mxu0 0.0
    %251 = vmatprep.subr.mxu0 0.0
    %252 = vmatpush1.xpose.msra.mxu0 0.0
    %253 = vmatprep.subr.mxu0 0.0
    %254 = vmatpush1.xpose.msra.mxu0 0.0
    %255 = vmatprep.subr.mxu0 0.0
    %256 = vmatpush1.xpose.msra.mxu0 0.0
    %257 = vmatprep.mubr.f32.mxu0 0.0
    %258 = vmatmul.mubr.f32.gmra.mrb[0].mxu0 %v189
    %v259 = vpop.f32.mrb[0].mxu0
    %v260 = vadd.f32 0.0, %v259
    %v261 = vpop.f32.mrb[0].mxu0
    %262 = vdwg.mxu0
    %v263 = vsel %vm188, %v260, -inf
    %264 = vmax.xlane.f32.xlu0 %v263
    %v265 = vpop.xlane.xlu0 %264
    %v266 = vsub.f32 %v260, %v265
    %v267 = vmul.f32 %v266, 1.442695
    %v268 = vpow.pop %v267
    %v269 = vsel %vm188, %v268, 0.0
    %270 = vadd.xlane.f32.xlu0 %v269
    %v271 = vpop.xlane.xlu0 %270
    %v272 = vrcp.pop %v271
    %v273 = vmul.f32 %v268, %v272
    %274 = vrot.lane.b32.xlu0 %v179, 64
    %v275 = vpop.permute.xlu0 %274
    %v278 = vsel %vm188, %v273, 0
    %280 = vmatprep.subr.mxu0 0.0
    %281 = vmatpush1.msra.mxu0 %v275
    %282 = vmatprep.subr.mxu0 0.0
    %283 = vmatpush1.msra.mxu0 0.0
    %284 = vmatprep.subr.mxu0 0.0
    %285 = vmatpush1.msra.mxu0 0.0
    %286 = vmatprep.subr.mxu0 0.0
    %287 = vmatpush1.msra.mxu0 0.0
    %288 = vmatprep.subr.mxu0 0.0
    %289 = vmatpush1.msra.mxu0 0.0
    %290 = vmatprep.subr.mxu0 0.0
    %291 = vmatpush1.msra.mxu0 0.0
    %292 = vmatprep.subr.mxu0 0.0
    %293 = vmatpush1.msra.mxu0 0.0
    %294 = vmatprep.subr.mxu0 0.0
    %295 = vmatpush1.msra.mxu0 0.0
    %296 = vmatprep.subr.mxu0 0.0
    %297 = vmatpush1.msra.mxu0 0.0
    %298 = vmatprep.subr.mxu0 0.0
    %299 = vmatpush1.msra.mxu0 0.0
    %300 = vmatprep.subr.mxu0 0.0
    %301 = vmatpush1.msra.mxu0 0.0
    %302 = vmatprep.subr.mxu0 0.0
    %303 = vmatpush1.msra.mxu0 0.0
    %304 = vmatprep.subr.mxu0 0.0
    %305 = vmatpush1.msra.mxu0 0.0
    %306 = vmatprep.subr.mxu0 0.0
    %307 = vmatpush1.msra.mxu0 0.0
    %308 = vmatprep.subr.mxu0 0.0
    %309 = vmatpush1.msra.mxu0 0.0
    %310 = vmatprep.subr.mxu0 0.0
    %311 = vmatpush1.msra.mxu0 0.0
    %312 = vmatprep.subr.mxu0 0.0
    %313 = vmatpush1.msra.mxu0 0.0
    %314 = vmatprep.subr.mxu0 0.0
    %315 = vmatpush1.msra.mxu0 0.0
    %316 = vmatprep.subr.mxu0 0.0
    %317 = vmatpush1.msra.mxu0 0.0
    %318 = vmatprep.subr.mxu0 0.0
    %319 = vmatpush1.msra.mxu0 0.0
    %320 = vmatprep.subr.mxu0 0.0
    %321 = vmatpush1.msra.mxu0 0.0
    %322 = vmatprep.subr.mxu0 0.0
    %323 = vmatpush1.msra.mxu0 0.0
    %324 = vmatprep.subr.mxu0 0.0
    %325 = vmatpush1.msra.mxu0 0.0
    %326 = vmatprep.subr.mxu0 0.0
    %327 = vmatpush1.msra.mxu0 0.0
    %328 = vmatprep.subr.mxu0 0.0
    %329 = vmatpush1.msra.mxu0 0.0
    %330 = vmatprep.subr.mxu0 0.0
    %331 = vmatpush1.msra.mxu0 0.0
    %332 = vmatprep.subr.mxu0 0.0
    %333 = vmatpush1.msra.mxu0 0.0
    %334 = vmatprep.subr.mxu0 0.0
    %335 = vmatpush1.msra.mxu0 0.0
    %336 = vmatprep.subr.mxu0 0.0
    %337 = vmatpush1.msra.mxu0 0.0
    %338 = vmatprep.subr.mxu0 0.0
    %339 = vmatpush1.msra.mxu0 0.0
    %340 = vmatprep.subr.mxu0 0.0
    %341 = vmatpush1.msra.mxu0 0.0
    %342 = vmatprep.subr.mxu0 0.0
    %343 = vmatpush1.msra.mxu0 0.0
    %344 = vmatprep.mubr.f32.mxu0 0.0
    %345 = vmatmul.mubr.f32.gmra.mrb[0].mxu0 %v278
    %v346 = vpop.f32.mrb[0].mxu0
    %v347 = vadd.f32 0.0, %v346
    %v348 = vpop.f32.mrb[0].mxu0
    %349 = vdwg.mxu0
    %350 = vst.msk [vmem:[#allocation3] sm:$0xff] %vm188, %v347
    %351 = vrot.lane.b32.xlu0 %v179, 120
    %v352 = vpop.permute.xlu0 %351
    %353 = vrot.lane.b32.xlu0 %v179, 88
    %v354 = vpop.permute.xlu0 %353
    %v355 = vsel %vm188, %v352, 0
    %v357 = vsel %vm188, %v354, 0
    %359 = vmatprep.subr.mxu0 0.0
    %360 = vmatpush1.xpose.msra.mxu0 %v357
    %361 = vmatprep.subr.mxu0 0.0
    %362 = vmatpush1.xpose.msra.mxu0 0.0
    %363 = vmatprep.subr.mxu0 0.0
    %364 = vmatpush1.xpose.msra.mxu0 0.0
    %365 = vmatprep.subr.mxu0 0.0
    %366 = vmatpush1.xpose.msra.mxu0 0.0
    %367 = vmatprep.subr.mxu0 0.0
    %368 = vmatpush1.xpose.msra.mxu0 0.0
    %369 = vmatprep.subr.mxu0 0.0
    %370 = vmatpush1.xpose.msra.mxu0 0.0
    %371 = vmatprep.subr.mxu0 0.0
    %372 = vmatpush1.xpose.msra.mxu0 0.0
    %373 = vmatprep.subr.mxu0 0.0
    %374 = vmatpush1.xpose.msra.mxu0 0.0
    %375 = vmatprep.subr.mxu0 0.0
    %376 = vmatpush1.xpose.msra.mxu0 0.0
    %377 = vmatprep.subr.mxu0 0.0
    %378 = vmatpush1.xpose.msra.mxu0 0.0
    %379 = vmatprep.subr.mxu0 0.0
    %380 = vmatpush1.xpose.msra.mxu0 0.0
    %381 = vmatprep.subr.mxu0 0.0
    %382 = vmatpush1.xpose.msra.mxu0 0.0
    %383 = vmatprep.subr.mxu0 0.0
    %384 = vmatpush1.xpose.msra.mxu0 0.0
    %385 = vmatprep.subr.mxu0 0.0
    %386 = vmatpush1.xpose.msra.mxu0 0.0
    %387 = vmatprep.subr.mxu0 0.0
    %388 = vmatpush1.xpose.msra.mxu0 0.0
    %389 = vmatprep.subr.mxu0 0.0
    %390 = vmatpush1.xpose.msra.mxu0 0.0
    %391 = vmatprep.subr.mxu0 0.0
    %392 = vmatpush1.xpose.msra.mxu0 0.0
    %393 = vmatprep.subr.mxu0 0.0
    %394 = vmatpush1.xpose.msra.mxu0 0.0
    %395 = vmatprep.subr.mxu0 0.0
    %396 = vmatpush1.xpose.msra.mxu0 0.0
    %397 = vmatprep.subr.mxu0 0.0
    %398 = vmatpush1.xpose.msra.mxu0 0.0
    %399 = vmatprep.subr.mxu0 0.0
    %400 = vmatpush1.xpose.msra.mxu0 0.0
    %401 = vmatprep.subr.mxu0 0.0
    %402 = vmatpush1.xpose.msra.mxu0 0.0
    %403 = vmatprep.subr.mxu0 0.0
    %404 = vmatpush1.xpose.msra.mxu0 0.0
    %405 = vmatprep.subr.mxu0 0.0
    %406 = vmatpush1.xpose.msra.mxu0 0.0
    %407 = vmatprep.subr.mxu0 0.0
    %408 = vmatpush1.xpose.msra.mxu0 0.0
    %409 = vmatprep.subr.mxu0 0.0
    %410 = vmatpush1.xpose.msra.mxu0 0.0
    %411 = vmatprep.subr.mxu0 0.0
    %412 = vmatpush1.xpose.msra.mxu0 0.0
    %413 = vmatprep.subr.mxu0 0.0
    %414 = vmatpush1.xpose.msra.mxu0 0.0
    %415 = vmatprep.subr.mxu0 0.0
    %416 = vmatpush1.xpose.msra.mxu0 0.0
    %417 = vmatprep.subr.mxu0 0.0
    %418 = vmatpush1.xpose.msra.mxu0 0.0
    %419 = vmatprep.subr.mxu0 0.0
    %420 = vmatpush1.xpose.msra.mxu0 0.0
    %421 = vmatprep.subr.mxu0 0.0
    %422 = vmatpush1.xpose.msra.mxu0 0.0
    %423 = vmatprep.mubr.f32.mxu0 0.0
    %424 = vmatmul.mubr.f32.gmra.mrb[0].mxu0 %v355
    %v425 = vpop.f32.mrb[0].mxu0
    %v426 = vadd.f32 0.0, %v425
    %v427 = vpop.f32.mrb[0].mxu0
    %428 = vdwg.mxu0
    %v429 = vsel %vm188, %v426, -inf
    %430 = vmax.xlane.f32.xlu0 %v429
    %v431 = vpop.xlane.xlu0 %430
    %v432 = vsub.f32 %v426, %v431
    %v433 = vmul.f32 %v432, 1.442695
    %v434 = vpow.pop %v433
    %v435 = vsel %vm188, %v434, 0.0
    %436 = vadd.xlane.f32.xlu0 %v435
    %v437 = vpop.xlane.xlu0 %436
    %v438 = vrcp.pop %v437
    %v439 = vmul.f32 %v434, %v438
    %440 = vrot.lane.b32.xlu0 %v179, 56
    %v441 = vpop.permute.xlu0 %440
    %v444 = vsel %vm188, %v439, 0
    %446 = vmatprep.subr.mxu0 0.0
    %447 = vmatpush1.msra.mxu0 %v441
    %448 = vmatprep.subr.mxu0 0.0
    %449 = vmatpush1.msra.mxu0 0.0
    %450 = vmatprep.subr.mxu0 0.0
    %451 = vmatpush1.msra.mxu0 0.0
    %452 = vmatprep.subr.mxu0 0.0
    %453 = vmatpush1.msra.mxu0 0.0
    %454 = vmatprep.subr.mxu0 0.0
    %455 = vmatpush1.msra.mxu0 0.0
    %456 = vmatprep.subr.mxu0 0.0
    %457 = vmatpush1.msra.mxu0 0.0
    %458 = vmatprep.subr.mxu0 0.0
    %459 = vmatpush1.msra.mxu0 0.0
    %460 = vmatprep.subr.mxu0 0.0
    %461 = vmatpush1.msra.mxu0 0.0
    %462 = vmatprep.subr.mxu0 0.0
    %463 = vmatpush1.msra.mxu0 0.0
    %464 = vmatprep.subr.mxu0 0.0
    %465 = vmatpush1.msra.mxu0 0.0
    %466 = vmatprep.subr.mxu0 0.0
    %467 = vmatpush1.msra.mxu0 0.0
    %468 = vmatprep.subr.mxu0 0.0
    %469 = vmatpush1.msra.mxu0 0.0
    %470 = vmatprep.subr.mxu0 0.0
    %471 = vmatpush1.msra.mxu0 0.0
    %472 = vmatprep.subr.mxu0 0.0
    %473 = vmatpush1.msra.mxu0 0.0
    %474 = vmatprep.subr.mxu0 0.0
    %475 = vmatpush1.msra.mxu0 0.0
    %476 = vmatprep.subr.mxu0 0.0
    %477 = vmatpush1.msra.mxu0 0.0
    %478 = vmatprep.subr.mxu0 0.0
    %479 = vmatpush1.msra.mxu0 0.0
    %480 = vmatprep.subr.mxu0 0.0
    %481 = vmatpush1.msra.mxu0 0.0
    %482 = vmatprep.subr.mxu0 0.0
    %483 = vmatpush1.msra.mxu0 0.0
    %484 = vmatprep.subr.mxu0 0.0
    %485 = vmatpush1.msra.mxu0 0.0
    %486 = vmatprep.subr.mxu0 0.0
    %487 = vmatpush1.msra.mxu0 0.0
    %488 = vmatprep.subr.mxu0 0.0
    %489 = vmatpush1.msra.mxu0 0.0
    %490 = vmatprep.subr.mxu0 0.0
    %491 = vmatpush1.msra.mxu0 0.0
    %492 = vmatprep.subr.mxu0 0.0
    %493 = vmatpush1.msra.mxu0 0.0
    %494 = vmatprep.subr.mxu0 0.0
    %495 = vmatpush1.msra.mxu0 0.0
    %496 = vmatprep.subr.mxu0 0.0
    %497 = vmatpush1.msra.mxu0 0.0
    %498 = vmatprep.subr.mxu0 0.0
    %499 = vmatpush1.msra.mxu0 0.0
    %500 = vmatprep.subr.mxu0 0.0
    %501 = vmatpush1.msra.mxu0 0.0
    %502 = vmatprep.subr.mxu0 0.0
    %503 = vmatpush1.msra.mxu0 0.0
    %504 = vmatprep.subr.mxu0 0.0
    %505 = vmatpush1.msra.mxu0 0.0
    %506 = vmatprep.subr.mxu0 0.0
    %507 = vmatpush1.msra.mxu0 0.0
    %508 = vmatprep.subr.mxu0 0.0
    %509 = vmatpush1.msra.mxu0 0.0
    %510 = vmatprep.mubr.f32.mxu0 0.0
    %511 = vmatmul.mubr.f32.gmra.mrb[0].mxu0 %v444
    %v512 = vpop.f32.mrb[0].mxu0
    %v513 = vadd.f32 0.0, %v512
    %v514 = vpop.f32.mrb[0].mxu0
    %515 = vdwg.mxu0
    %517 = vrot.lane.b32.xlu0 %v513, 8
    %v518 = vpop.permute.xlu0 %517
    %vm520 = vcmask 130112
    %521 = vst.msk [vmem:[#allocation3] sm:$0xff] %vm520, %v518
    %522 = vrot.lane.b32.xlu0 %v179, 112
    %v523 = vpop.permute.xlu0 %522
    %524 = vrot.lane.b32.xlu0 %v179, 80
    %v525 = vpop.permute.xlu0 %524
    %v526 = vsel %vm188, %v523, 0
    %v528 = vsel %vm188, %v525, 0
    %530 = vmatprep.subr.mxu0 0.0
    %531 = vmatpush1.xpose.msra.mxu0 %v528
    %532 = vmatprep.subr.mxu0 0.0
    %533 = vmatpush1.xpose.msra.mxu0 0.0
    %534 = vmatprep.subr.mxu0 0.0
    %535 = vmatpush1.xpose.msra.mxu0 0.0
    %536 = vmatprep.subr.mxu0 0.0
    %537 = vmatpush1.xpose.msra.mxu0 0.0
    %538 = vmatprep.subr.mxu0 0.0
    %539 = vmatpush1.xpose.msra.mxu0 0.0
    %540 = vmatprep.subr.mxu0 0.0
    %541 = vmatpush1.xpose.msra.mxu0 0.0
    %542 = vmatprep.subr.mxu0 0.0
    %543 = vmatpush1.xpose.msra.mxu0 0.0
    %544 = vmatprep.subr.mxu0 0.0
    %545 = vmatpush1.xpose.msra.mxu0 0.0
    %546 = vmatprep.subr.mxu0 0.0
    %547 = vmatpush1.xpose.msra.mxu0 0.0
    %548 = vmatprep.subr.mxu0 0.0
    %549 = vmatpush1.xpose.msra.mxu0 0.0
    %550 = vmatprep.subr.mxu0 0.0
    %551 = vmatpush1.xpose.msra.mxu0 0.0
    %552 = vmatprep.subr.mxu0 0.0
    %553 = vmatpush1.xpose.msra.mxu0 0.0
    %554 = vmatprep.subr.mxu0 0.0
    %555 = vmatpush1.xpose.msra.mxu0 0.0
    %556 = vmatprep.subr.mxu0 0.0
    %557 = vmatpush1.xpose.msra.mxu0 0.0
    %558 = vmatprep.subr.mxu0 0.0
    %559 = vmatpush1.xpose.msra.mxu0 0.0
    %560 = vmatprep.subr.mxu0 0.0
    %561 = vmatpush1.xpose.msra.mxu0 0.0
    %562 = vmatprep.subr.mxu0 0.0
    %563 = vmatpush1.xpose.msra.mxu0 0.0
    %564 = vmatprep.subr.mxu0 0.0
    %565 = vmatpush1.xpose.msra.mxu0 0.0
    %566 = vmatprep.subr.mxu0 0.0
    %567 = vmatpush1.xpose.msra.mxu0 0.0
    %568 = vmatprep.subr.mxu0 0.0
    %569 = vmatpush1.xpose.msra.mxu0 0.0
    %570 = vmatprep.subr.mxu0 0.0
    %571 = vmatpush1.xpose.msra.mxu0 0.0
    %572 = vmatprep.subr.mxu0 0.0
    %573 = vmatpush1.xpose.msra.mxu0 0.0
    %574 = vmatprep.subr.mxu0 0.0
    %575 = vmatpush1.xpose.msra.mxu0 0.0
    %576 = vmatprep.subr.mxu0 0.0
    %577 = vmatpush1.xpose.msra.mxu0 0.0
    %578 = vmatprep.subr.mxu0 0.0
    %579 = vmatpush1.xpose.msra.mxu0 0.0
    %580 = vmatprep.subr.mxu0 0.0
    %581 = vmatpush1.xpose.msra.mxu0 0.0
    %582 = vmatprep.subr.mxu0 0.0
    %583 = vmatpush1.xpose.msra.mxu0 0.0
    %584 = vmatprep.subr.mxu0 0.0
    %585 = vmatpush1.xpose.msra.mxu0 0.0
    %586 = vmatprep.subr.mxu0 0.0
    %587 = vmatpush1.xpose.msra.mxu0 0.0
    %588 = vmatprep.subr.mxu0 0.0
    %589 = vmatpush1.xpose.msra.mxu0 0.0
    %590 = vmatprep.subr.mxu0 0.0
    %591 = vmatpush1.xpose.msra.mxu0 0.0
    %592 = vmatprep.subr.mxu0 0.0
    %593 = vmatpush1.xpose.msra.mxu0 0.0
    %594 = vmatprep.mubr.f32.mxu0 0.0
    %595 = vmatmul.mubr.f32.gmra.mrb[0].mxu0 %v526
    %v596 = vpop.f32.mrb[0].mxu0
    %v597 = vadd.f32 0.0, %v596
    %v598 = vpop.f32.mrb[0].mxu0
    %599 = vdwg.mxu0
    %v600 = vsel %vm188, %v597, -inf
    %601 = vmax.xlane.f32.xlu0 %v600
    %v602 = vpop.xlane.xlu0 %601
    %v603 = vsub.f32 %v597, %v602
    %v604 = vmul.f32 %v603, 1.442695
    %v605 = vpow.pop %v604
    %v606 = vsel %vm188, %v605, 0.0
    %607 = vadd.xlane.f32.xlu0 %v606
    %v608 = vpop.xlane.xlu0 %607
    %v609 = vrcp.pop %v608
    %v610 = vmul.f32 %v605, %v609
    %611 = vrot.lane.b32.xlu0 %v179, 48
    %v612 = vpop.permute.xlu0 %611
    %v615 = vsel %vm188, %v610, 0
    %617 = vmatprep.subr.mxu0 0.0
    %618 = vmatpush1.msra.mxu0 %v612
    %619 = vmatprep.subr.mxu0 0.0
    %620 = vmatpush1.msra.mxu0 0.0
    %621 = vmatprep.subr.mxu0 0.0
    %622 = vmatpush1.msra.mxu0 0.0
    %623 = vmatprep.subr.mxu0 0.0
    %624 = vmatpush1.msra.mxu0 0.0
    %625 = vmatprep.subr.mxu0 0.0
    %626 = vmatpush1.msra.mxu0 0.0
    %627 = vmatprep.subr.mxu0 0.0
    %628 = vmatpush1.msra.mxu0 0.0
    %629 = vmatprep.subr.mxu0 0.0
    %630 = vmatpush1.msra.mxu0 0.0
    %631 = vmatprep.subr.mxu0 0.0
    %632 = vmatpush1.msra.mxu0 0.0
    %633 = vmatprep.subr.mxu0 0.0
    %634 = vmatpush1.msra.mxu0 0.0
    %635 = vmatprep.subr.mxu0 0.0
    %636 = vmatpush1.msra.mxu0 0.0
    %637 = vmatprep.subr.mxu0 0.0
    %638 = vmatpush1.msra.mxu0 0.0
    %639 = vmatprep.subr.mxu0 0.0
    %640 = vmatpush1.msra.mxu0 0.0
    %641 = vmatprep.subr.mxu0 0.0
    %642 = vmatpush1.msra.mxu0 0.0
    %643 = vmatprep.subr.mxu0 0.0
    %644 = vmatpush1.msra.mxu0 0.0
    %645 = vmatprep.subr.mxu0 0.0
    %646 = vmatpush1.msra.mxu0 0.0
    %647 = vmatprep.subr.mxu0 0.0
    %648 = vmatpush1.msra.mxu0 0.0
    %649 = vmatprep.subr.mxu0 0.0
    %650 = vmatpush1.msra.mxu0 0.0
    %651 = vmatprep.subr.mxu0 0.0
    %652 = vmatpush1.msra.mxu0 0.0
    %653 = vmatprep.subr.mxu0 0.0
    %654 = vmatpush1.msra.mxu0 0.0
    %655 = vmatprep.subr.mxu0 0.0
    %656 = vmatpush1.msra.mxu0 0.0
    %657 = vmatprep.subr.mxu0 0.0
    %658 = vmatpush1.msra.mxu0 0.0
    %659 = vmatprep.subr.mxu0 0.0
    %660 = vmatpush1.msra.mxu0 0.0
    %661 = vmatprep.subr.mxu0 0.0
    %662 = vmatpush1.msra.mxu0 0.0
    %663 = vmatprep.subr.mxu0 0.0
    %664 = vmatpush1.msra.mxu0 0.0
    %665 = vmatprep.subr.mxu0 0.0
    %666 = vmatpush1.msra.mxu0 0.0
    %667 = vmatprep.subr.mxu0 0.0
    %668 = vmatpush1.msra.mxu0 0.0
    %669 = vmatprep.subr.mxu0 0.0
    %670 = vmatpush1.msra.mxu0 0.0
    %671 = vmatprep.subr.mxu0 0.0
    %672 = vmatpush1.msra.mxu0 0.0
    %673 = vmatprep.subr.mxu0 0.0
    %674 = vmatpush1.msra.mxu0 0.0
    %675 = vmatprep.subr.mxu0 0.0
    %676 = vmatpush1.msra.mxu0 0.0
    %677 = vmatprep.subr.mxu0 0.0
    %678 = vmatpush1.msra.mxu0 0.0
    %679 = vmatprep.subr.mxu0 0.0
    %680 = vmatpush1.msra.mxu0 0.0
    %681 = vmatprep.mubr.f32.mxu0 0.0
    %682 = vmatmul.mubr.f32.gmra.mrb[0].mxu0 %v615
    %v683 = vpop.f32.mrb[0].mxu0
    %v684 = vadd.f32 0.0, %v683
    %v685 = vpop.f32.mrb[0].mxu0
    %686 = vdwg.mxu0
    %688 = vrot.lane.b32.xlu0 %v684, 16
    %v689 = vpop.permute.xlu0 %688
    %vm691 = vcmask 195712
    %692 = vst.msk [vmem:[#allocation3] sm:$0xff] %vm691, %v689
    %693 = vrot.lane.b32.xlu0 %v179, 104
    %v694 = vpop.permute.xlu0 %693
    %695 = vrot.lane.b32.xlu0 %v179, 72
    %v696 = vpop.permute.xlu0 %695
    %v697 = vsel %vm188, %v694, 0
    %v699 = vsel %vm188, %v696, 0
    %701 = vmatprep.subr.mxu0 0.0
    %702 = vmatpush1.xpose.msra.mxu0 %v699
    %703 = vmatprep.subr.mxu0 0.0
    %704 = vmatpush1.xpose.msra.mxu0 0.0
    %705 = vmatprep.subr.mxu0 0.0
    %706 = vmatpush1.xpose.msra.mxu0 0.0
    %707 = vmatprep.subr.mxu0 0.0
    %708 = vmatpush1.xpose.msra.mxu0 0.0
    %709 = vmatprep.subr.mxu0 0.0
    %710 = vmatpush1.xpose.msra.mxu0 0.0
    %711 = vmatprep.subr.mxu0 0.0
    %712 = vmatpush1.xpose.msra.mxu0 0.0
    %713 = vmatprep.subr.mxu0 0.0
    %714 = vmatpush1.xpose.msra.mxu0 0.0
    %715 = vmatprep.subr.mxu0 0.0
    %716 = vmatpush1.xpose.msra.mxu0 0.0
    %717 = vmatprep.subr.mxu0 0.0
    %718 = vmatpush1.xpose.msra.mxu0 0.0
    %719 = vmatprep.subr.mxu0 0.0
    %720 = vmatpush1.xpose.msra.mxu0 0.0
    %721 = vmatprep.subr.mxu0 0.0
    %722 = vmatpush1.xpose.msra.mxu0 0.0
    %723 = vmatprep.subr.mxu0 0.0
    %724 = vmatpush1.xpose.msra.mxu0 0.0
    %725 = vmatprep.subr.mxu0 0.0
    %726 = vmatpush1.xpose.msra.mxu0 0.0
    %727 = vmatprep.subr.mxu0 0.0
    %728 = vmatpush1.xpose.msra.mxu0 0.0
    %729 = vmatprep.subr.mxu0 0.0
    %730 = vmatpush1.xpose.msra.mxu0 0.0
    %731 = vmatprep.subr.mxu0 0.0
    %732 = vmatpush1.xpose.msra.mxu0 0.0
    %733 = vmatprep.subr.mxu0 0.0
    %734 = vmatpush1.xpose.msra.mxu0 0.0
    %735 = vmatprep.subr.mxu0 0.0
    %736 = vmatpush1.xpose.msra.mxu0 0.0
    %737 = vmatprep.subr.mxu0 0.0
    %738 = vmatpush1.xpose.msra.mxu0 0.0
    %739 = vmatprep.subr.mxu0 0.0
    %740 = vmatpush1.xpose.msra.mxu0 0.0
    %741 = vmatprep.subr.mxu0 0.0
    %742 = vmatpush1.xpose.msra.mxu0 0.0
    %743 = vmatprep.subr.mxu0 0.0
    %744 = vmatpush1.xpose.msra.mxu0 0.0
    %745 = vmatprep.subr.mxu0 0.0
    %746 = vmatpush1.xpose.msra.mxu0 0.0
    %747 = vmatprep.subr.mxu0 0.0
    %748 = vmatpush1.xpose.msra.mxu0 0.0
    %749 = vmatprep.subr.mxu0 0.0
    %750 = vmatpush1.xpose.msra.mxu0 0.0
    %751 = vmatprep.subr.mxu0 0.0
    %752 = vmatpush1.xpose.msra.mxu0 0.0
    %753 = vmatprep.subr.mxu0 0.0
    %754 = vmatpush1.xpose.msra.mxu0 0.0
    %755 = vmatprep.subr.mxu0 0.0
    %756 = vmatpush1.xpose.msra.mxu0 0.0
    %757 = vmatprep.subr.mxu0 0.0
    %758 = vmatpush1.xpose.msra.mxu0 0.0
    %759 = vmatprep.subr.mxu0 0.0
    %760 = vmatpush1.xpose.msra.mxu0 0.0
    %761 = vmatprep.subr.mxu0 0.0
    %762 = vmatpush1.xpose.msra.mxu0 0.0
    %763 = vmatprep.subr.mxu0 0.0
    %764 = vmatpush1.xpose.msra.mxu0 0.0
    %765 = vmatprep.mubr.f32.mxu0 0.0
    %766 = vmatmul.mubr.f32.gmra.mrb[0].mxu0 %v697
    %v767 = vpop.f32.mrb[0].mxu0
    %v768 = vadd.f32 0.0, %v767
    %v769 = vpop.f32.mrb[0].mxu0
    %770 = vdwg.mxu0
    %v771 = vsel %vm188, %v768, -inf
    %772 = vmax.xlane.f32.xlu0 %v771
    %v773 = vpop.xlane.xlu0 %772
    %v774 = vsub.f32 %v768, %v773
    %v775 = vmul.f32 %v774, 1.442695
    %v776 = vpow.pop %v775
    %v777 = vsel %vm188, %v776, 0.0
    %778 = vadd.xlane.f32.xlu0 %v777
    %v779 = vpop.xlane.xlu0 %778
    %v780 = vrcp.pop %v779
    %v781 = vmul.f32 %v776, %v780
    %782 = vrot.lane.b32.xlu0 %v179, 40
    %v783 = vpop.permute.xlu0 %782
    %v786 = vsel %vm188, %v781, 0
    %788 = vmatprep.subr.mxu0 0.0
    %789 = vmatpush1.msra.mxu0 %v783
    %790 = vmatprep.subr.mxu0 0.0
    %791 = vmatpush1.msra.mxu0 0.0
    %792 = vmatprep.subr.mxu0 0.0
    %793 = vmatpush1.msra.mxu0 0.0
    %794 = vmatprep.subr.mxu0 0.0
    %795 = vmatpush1.msra.mxu0 0.0
    %796 = vmatprep.subr.mxu0 0.0
    %797 = vmatpush1.msra.mxu0 0.0
    %798 = vmatprep.subr.mxu0 0.0
    %799 = vmatpush1.msra.mxu0 0.0
    %800 = vmatprep.subr.mxu0 0.0
    %801 = vmatpush1.msra.mxu0 0.0
    %802 = vmatprep.subr.mxu0 0.0
    %803 = vmatpush1.msra.mxu0 0.0
    %804 = vmatprep.subr.mxu0 0.0
    %805 = vmatpush1.msra.mxu0 0.0
    %806 = vmatprep.subr.mxu0 0.0
    %807 = vmatpush1.msra.mxu0 0.0
    %808 = vmatprep.subr.mxu0 0.0
    %809 = vmatpush1.msra.mxu0 0.0
    %810 = vmatprep.subr.mxu0 0.0
    %811 = vmatpush1.msra.mxu0 0.0
    %812 = vmatprep.subr.mxu0 0.0
    %813 = vmatpush1.msra.mxu0 0.0
    %814 = vmatprep.subr.mxu0 0.0
    %815 = vmatpush1.msra.mxu0 0.0
    %816 = vmatprep.subr.mxu0 0.0
    %817 = vmatpush1.msra.mxu0 0.0
    %818 = vmatprep.subr.mxu0 0.0
    %819 = vmatpush1.msra.mxu0 0.0
    %820 = vmatprep.subr.mxu0 0.0
    %821 = vmatpush1.msra.mxu0 0.0
    %822 = vmatprep.subr.mxu0 0.0
    %823 = vmatpush1.msra.mxu0 0.0
    %824 = vmatprep.subr.mxu0 0.0
    %825 = vmatpush1.msra.mxu0 0.0
    %826 = vmatprep.subr.mxu0 0.0
    %827 = vmatpush1.msra.mxu0 0.0
    %828 = vmatprep.subr.mxu0 0.0
    %829 = vmatpush1.msra.mxu0 0.0
    %830 = vmatprep.subr.mxu0 0.0
    %831 = vmatpush1.msra.mxu0 0.0
    %832 = vmatprep.subr.mxu0 0.0
    %833 = vmatpush1.msra.mxu0 0.0
    %834 = vmatprep.subr.mxu0 0.0
    %835 = vmatpush1.msra.mxu0 0.0
    %836 = vmatprep.subr.mxu0 0.0
    %837 = vmatpush1.msra.mxu0 0.0
    %838 = vmatprep.subr.mxu0 0.0
    %839 = vmatpush1.msra.mxu0 0.0
    %840 = vmatprep.subr.mxu0 0.0
    %841 = vmatpush1.msra.mxu0 0.0
    %842 = vmatprep.subr.mxu0 0.0
    %843 = vmatpush1.msra.mxu0 0.0
    %844 = vmatprep.subr.mxu0 0.0
    %845 = vmatpush1.msra.mxu0 0.0
    %846 = vmatprep.subr.mxu0 0.0
    %847 = vmatpush1.msra.mxu0 0.0
    %848 = vmatprep.subr.mxu0 0.0
    %849 = vmatpush1.msra.mxu0 0.0
    %850 = vmatprep.subr.mxu0 0.0
    %851 = vmatpush1.msra.mxu0 0.0
    %852 = vmatprep.mubr.f32.mxu0 0.0
    %853 = vmatmul.mubr.f32.gmra.mrb[0].mxu0 %v786
    %v854 = vpop.f32.mrb[0].mxu0
    %v855 = vadd.f32 0.0, %v854
    %v856 = vpop.f32.mrb[0].mxu0
    %857 = vdwg.mxu0
    %859 = vrot.lane.b32.xlu0 %v855, 24
    %v860 = vpop.permute.xlu0 %859
    %vm862 = vcmask 261312
    %863 = vst.msk [vmem:[#allocation3] sm:$0xff] %vm862, %v860
    %865 = vrot.lane.b32.xlu0 %v182, 96
    %v866 = vpop.permute.xlu0 %865
    %v867 = vsel %vm188, %v182, 0
    %v869 = vsel %vm188, %v866, 0
    %871 = vmatprep.subr.mxu0 0.0
    %872 = vmatpush1.xpose.msra.mxu0 %v869
    %873 = vmatprep.subr.mxu0 0.0
    %874 = vmatpush1.xpose.msra.mxu0 0.0
    %875 = vmatprep.subr.mxu0 0.0
    %876 = vmatpush1.xpose.msra.mxu0 0.0
    %877 = vmatprep.subr.mxu0 0.0
    %878 = vmatpush1.xpose.msra.mxu0 0.0
    %879 = vmatprep.subr.mxu0 0.0
    %880 = vmatpush1.xpose.msra.mxu0 0.0
    %881 = vmatprep.subr.mxu0 0.0
    %882 = vmatpush1.xpose.msra.mxu0 0.0
    %883 = vmatprep.subr.mxu0 0.0
    %884 = vmatpush1.xpose.msra.mxu0 0.0
    %885 = vmatprep.subr.mxu0 0.0
    %886 = vmatpush1.xpose.msra.mxu0 0.0
    %887 = vmatprep.subr.mxu0 0.0
    %888 = vmatpush1.xpose.msra.mxu0 0.0
    %889 = vmatprep.subr.mxu0 0.0
    %890 = vmatpush1.xpose.msra.mxu0 0.0
    %891 = vmatprep.subr.mxu0 0.0
    %892 = vmatpush1.xpose.msra.mxu0 0.0
    %893 = vmatprep.subr.mxu0 0.0
    %894 = vmatpush1.xpose.msra.mxu0 0.0
    %895 = vmatprep.subr.mxu0 0.0
    %896 = vmatpush1.xpose.msra.mxu0 0.0
    %897 = vmatprep.subr.mxu0 0.0
    %898 = vmatpush1.xpose.msra.mxu0 0.0
    %899 = vmatprep.subr.mxu0 0.0
    %900 = vmatpush1.xpose.msra.mxu0 0.0
    %901 = vmatprep.subr.mxu0 0.0
    %902 = vmatpush1.xpose.msra.mxu0 0.0
    %903 = vmatprep.subr.mxu0 0.0
    %904 = vmatpush1.xpose.msra.mxu0 0.0
    %905 = vmatprep.subr.mxu0 0.0
    %906 = vmatpush1.xpose.msra.mxu0 0.0
    %907 = vmatprep.subr.mxu0 0.0
    %908 = vmatpush1.xpose.msra.mxu0 0.0
    %909 = vmatprep.subr.mxu0 0.0
    %910 = vmatpush1.xpose.msra.mxu0 0.0
    %911 = vmatprep.subr.mxu0 0.0
    %912 = vmatpush1.xpose.msra.mxu0 0.0
    %913 = vmatprep.subr.mxu0 0.0
    %914 = vmatpush1.xpose.msra.mxu0 0.0
    %915 = vmatprep.subr.mxu0 0.0
    %916 = vmatpush1.xpose.msra.mxu0 0.0
    %917 = vmatprep.subr.mxu0 0.0
    %918 = vmatpush1.xpose.msra.mxu0 0.0
    %919 = vmatprep.subr.mxu0 0.0
    %920 = vmatpush1.xpose.msra.mxu0 0.0
    %921 = vmatprep.subr.mxu0 0.0
    %922 = vmatpush1.xpose.msra.mxu0 0.0
    %923 = vmatprep.subr.mxu0 0.0
    %924 = vmatpush1.xpose.msra.mxu0 0.0
    %925 = vmatprep.subr.mxu0 0.0
    %926 = vmatpush1.xpose.msra.mxu0 0.0
    %927 = vmatprep.subr.mxu0 0.0
    %928 = vmatpush1.xpose.msra.mxu0 0.0
    %929 = vmatprep.subr.mxu0 0.0
    %930 = vmatpush1.xpose.msra.mxu0 0.0
    %931 = vmatprep.subr.mxu0 0.0
    %932 = vmatpush1.xpose.msra.mxu0 0.0
    %933 = vmatprep.subr.mxu0 0.0
    %934 = vmatpush1.xpose.msra.mxu0 0.0
    %935 = vmatprep.mubr.f32.mxu0 0.0
    %936 = vmatmul.mubr.f32.gmra.mrb[0].mxu0 %v867
    %v937 = vpop.f32.mrb[0].mxu0
    %v938 = vadd.f32 0.0, %v937
    %v939 = vpop.f32.mrb[0].mxu0
    %940 = vdwg.mxu0
    %v941 = vsel %vm188, %v938, -inf
    %942 = vmax.xlane.f32.xlu0 %v941
    %v943 = vpop.xlane.xlu0 %942
    %v944 = vsub.f32 %v938, %v943
    %v945 = vmul.f32 %v944, 1.442695
    %v946 = vpow.pop %v945
    %v947 = vsel %vm188, %v946, 0.0
    %948 = vadd.xlane.f32.xlu0 %v947
    %v949 = vpop.xlane.xlu0 %948
    %v950 = vrcp.pop %v949
    %v951 = vmul.f32 %v946, %v950
    %952 = vrot.lane.b32.xlu0 %v182, 64
    %v953 = vpop.permute.xlu0 %952
    %v956 = vsel %vm188, %v951, 0
    %958 = vmatprep.subr.mxu0 0.0
    %959 = vmatpush1.msra.mxu0 %v953
    %960 = vmatprep.subr.mxu0 0.0
    %961 = vmatpush1.msra.mxu0 0.0
    %962 = vmatprep.subr.mxu0 0.0
    %963 = vmatpush1.msra.mxu0 0.0
    %964 = vmatprep.subr.mxu0 0.0
    %965 = vmatpush1.msra.mxu0 0.0
    %966 = vmatprep.subr.mxu0 0.0
    %967 = vmatpush1.msra.mxu0 0.0
    %968 = vmatprep.subr.mxu0 0.0
    %969 = vmatpush1.msra.mxu0 0.0
    %970 = vmatprep.subr.mxu0 0.0
    %971 = vmatpush1.msra.mxu0 0.0
    %972 = vmatprep.subr.mxu0 0.0
    %973 = vmatpush1.msra.mxu0 0.0
    %974 = vmatprep.subr.mxu0 0.0
    %975 = vmatpush1.msra.mxu0 0.0
    %976 = vmatprep.subr.mxu0 0.0
    %977 = vmatpush1.msra.mxu0 0.0
    %978 = vmatprep.subr.mxu0 0.0
    %979 = vmatpush1.msra.mxu0 0.0
    %980 = vmatprep.subr.mxu0 0.0
    %981 = vmatpush1.msra.mxu0 0.0
    %982 = vmatprep.subr.mxu0 0.0
    %983 = vmatpush1.msra.mxu0 0.0
    %984 = vmatprep.subr.mxu0 0.0
    %985 = vmatpush1.msra.mxu0 0.0
    %986 = vmatprep.subr.mxu0 0.0
    %987 = vmatpush1.msra.mxu0 0.0
    %988 = vmatprep.subr.mxu0 0.0
    %989 = vmatpush1.msra.mxu0 0.0
    %990 = vmatprep.subr.mxu0 0.0
    %991 = vmatpush1.msra.mxu0 0.0
    %992 = vmatprep.subr.mxu0 0.0
    %993 = vmatpush1.msra.mxu0 0.0
    %994 = vmatprep.subr.mxu0 0.0
    %995 = vmatpush1.msra.mxu0 0.0
    %996 = vmatprep.subr.mxu0 0.0
    %997 = vmatpush1.msra.mxu0 0.0
    %998 = vmatprep.subr.mxu0 0.0
    %999 = vmatpush1.msra.mxu0 0.0
    %1000 = vmatprep.subr.mxu0 0.0
    %1001 = vmatpush1.msra.mxu0 0.0
    %1002 = vmatprep.subr.mxu0 0.0
    %1003 = vmatpush1.msra.mxu0 0.0
    %1004 = vmatprep.subr.mxu0 0.0
    %1005 = vmatpush1.msra.mxu0 0.0
    %1006 = vmatprep.subr.mxu0 0.0
    %1007 = vmatpush1.msra.mxu0 0.0
    %1008 = vmatprep.subr.mxu0 0.0
    %1009 = vmatpush1.msra.mxu0 0.0
    %1010 = vmatprep.subr.mxu0 0.0
    %1011 = vmatpush1.msra.mxu0 0.0
    %1012 = vmatprep.subr.mxu0 0.0
    %1013 = vmatpush1.msra.mxu0 0.0
    %1014 = vmatprep.subr.mxu0 0.0
    %1015 = vmatpush1.msra.mxu0 0.0
    %1016 = vmatprep.subr.mxu0 0.0
    %1017 = vmatpush1.msra.mxu0 0.0
    %1018 = vmatprep.subr.mxu0 0.0
    %1019 = vmatpush1.msra.mxu0 0.0
    %1020 = vmatprep.subr.mxu0 0.0
    %1021 = vmatpush1.msra.mxu0 0.0
    %1022 = vmatprep.mubr.f32.mxu0 0.0
    %1023 = vmatmul.mubr.f32.gmra.mrb[0].mxu0 %v956
    %v1024 = vpop.f32.mrb[0].mxu0
    %v1025 = vadd.f32 0.0, %v1024
    %v1026 = vpop.f32.mrb[0].mxu0
    %1027 = vdwg.mxu0
    %1028 = vst.msk [vmem:[#allocation3 + $0x8] sm:$0xff] %vm188, %v1025
    %1029 = vrot.lane.b32.xlu0 %v182, 120
    %v1030 = vpop.permute.xlu0 %1029
    %1031 = vrot.lane.b32.xlu0 %v182, 88
    %v1032 = vpop.permute.xlu0 %1031
    %v1033 = vsel %vm188, %v1030, 0
    %v1035 = vsel %vm188, %v1032, 0
    %1037 = vmatprep.subr.mxu0 0.0
    %1038 = vmatpush1.xpose.msra.mxu0 %v1035
    %1039 = vmatprep.subr.mxu0 0.0
    %1040 = vmatpush1.xpose.msra.mxu0 0.0
    %1041 = vmatprep.subr.mxu0 0.0
    %1042 = vmatpush1.xpose.msra.mxu0 0.0
    %1043 = vmatprep.subr.mxu0 0.0
    %1044 = vmatpush1.xpose.msra.mxu0 0.0
    %1045 = vmatprep.subr.mxu0 0.0
    %1046 = vmatpush1.xpose.msra.mxu0 0.0
    %1047 = vmatprep.subr.mxu0 0.0
    %1048 = vmatpush1.xpose.msra.mxu0 0.0
    %1049 = vmatprep.subr.mxu0 0.0
    %1050 = vmatpush1.xpose.msra.mxu0 0.0
    %1051 = vmatprep.subr.mxu0 0.0
    %1052 = vmatpush1.xpose.msra.mxu0 0.0
    %1053 = vmatprep.subr.mxu0 0.0
    %1054 = vmatpush1.xpose.msra.mxu0 0.0
    %1055 = vmatprep.subr.mxu0 0.0
    %1056 = vmatpush1.xpose.msra.mxu0 0.0
    %1057 = vmatprep.subr.mxu0 0.0
    %1058 = vmatpush1.xpose.msra.mxu0 0.0
    %1059 = vmatprep.subr.mxu0 0.0
    %1060 = vmatpush1.xpose.msra.mxu0 0.0
    %1061 = vmatprep.subr.mxu0 0.0
    %1062 = vmatpush1.xpose.msra.mxu0 0.0
    %1063 = vmatprep.subr.mxu0 0.0
    %1064 = vmatpush1.xpose.msra.mxu0 0.0
    %1065 = vmatprep.subr.mxu0 0.0
    %1066 = vmatpush1.xpose.msra.mxu0 0.0
    %1067 = vmatprep.subr.mxu0 0.0
    %1068 = vmatpush1.xpose.msra.mxu0 0.0
    %1069 = vmatprep.subr.mxu0 0.0
    %1070 = vmatpush1.xpose.msra.mxu0 0.0
    %1071 = vmatprep.subr.mxu0 0.0
    %1072 = vmatpush1.xpose.msra.mxu0 0.0
    %1073 = vmatprep.subr.mxu0 0.0
    %1074 = vmatpush1.xpose.msra.mxu0 0.0
    %1075 = vmatprep.subr.mxu0 0.0
    %1076 = vmatpush1.xpose.msra.mxu0 0.0
    %1077 = vmatprep.subr.mxu0 0.0
    %1078 = vmatpush1.xpose.msra.mxu0 0.0
    %1079 = vmatprep.subr.mxu0 0.0
    %1080 = vmatpush1.xpose.msra.mxu0 0.0
    %1081 = vmatprep.subr.mxu0 0.0
    %1082 = vmatpush1.xpose.msra.mxu0 0.0
    %1083 = vmatprep.subr.mxu0 0.0
    %1084 = vmatpush1.xpose.msra.mxu0 0.0
    %1085 = vmatprep.subr.mxu0 0.0
    %1086 = vmatpush1.xpose.msra.mxu0 0.0
    %1087 = vmatprep.subr.mxu0 0.0
    %1088 = vmatpush1.xpose.msra.mxu0 0.0
    %1089 = vmatprep.subr.mxu0 0.0
    %1090 = vmatpush1.xpose.msra.mxu0 0.0
    %1091 = vmatprep.subr.mxu0 0.0
    %1092 = vmatpush1.xpose.msra.mxu0 0.0
    %1093 = vmatprep.subr.mxu0 0.0
    %1094 = vmatpush1.xpose.msra.mxu0 0.0
    %1095 = vmatprep.subr.mxu0 0.0
    %1096 = vmatpush1.xpose.msra.mxu0 0.0
    %1097 = vmatprep.subr.mxu0 0.0
    %1098 = vmatpush1.xpose.msra.mxu0 0.0
    %1099 = vmatprep.subr.mxu0 0.0
    %1100 = vmatpush1.xpose.msra.mxu0 0.0
    %1101 = vmatprep.mubr.f32.mxu0 0.0
    %1102 = vmatmul.mubr.f32.gmra.mrb[0].mxu0 %v1033
    %v1103 = vpop.f32.mrb[0].mxu0
    %v1104 = vadd.f32 0.0, %v1103
    %v1105 = vpop.f32.mrb[0].mxu0
    %1106 = vdwg.mxu0
    %v1107 = vsel %vm188, %v1104, -inf
    %1108 = vmax.xlane.f32.xlu0 %v1107
    %v1109 = vpop.xlane.xlu0 %1108
    %v1110 = vsub.f32 %v1104, %v1109
    %v1111 = vmul.f32 %v1110, 1.442695
    %v1112 = vpow.pop %v1111
    %v1113 = vsel %vm188, %v1112, 0.0
    %1114 = vadd.xlane.f32.xlu0 %v1113
    %v1115 = vpop.xlane.xlu0 %1114
    %v1116 = vrcp.pop %v1115
    %v1117 = vmul.f32 %v1112, %v1116
    %1118 = vrot.lane.b32.xlu0 %v182, 56
    %v1119 = vpop.permute.xlu0 %1118
    %v1122 = vsel %vm188, %v1117, 0
    %1124 = vmatprep.subr.mxu0 0.0
    %1125 = vmatpush1.msra.mxu0 %v1119
    %1126 = vmatprep.subr.mxu0 0.0
    %1127 = vmatpush1.msra.mxu0 0.0
    %1128 = vmatprep.subr.mxu0 0.0
    %1129 = vmatpush1.msra.mxu0 0.0
    %1130 = vmatprep.subr.mxu0 0.0
    %1131 = vmatpush1.msra.mxu0 0.0
    %1132 = vmatprep.subr.mxu0 0.0
    %1133 = vmatpush1.msra.mxu0 0.0
    %1134 = vmatprep.subr.mxu0 0.0
    %1135 = vmatpush1.msra.mxu0 0.0
    %1136 = vmatprep.subr.mxu0 0.0
    %1137 = vmatpush1.msra.mxu0 0.0
    %1138 = vmatprep.subr.mxu0 0.0
    %1139 = vmatpush1.msra.mxu0 0.0
    %1140 = vmatprep.subr.mxu0 0.0
    %1141 = vmatpush1.msra.mxu0 0.0
    %1142 = vmatprep.subr.mxu0 0.0
    %1143 = vmatpush1.msra.mxu0 0.0
    %1144 = vmatprep.subr.mxu0 0.0
    %1145 = vmatpush1.msra.mxu0 0.0
    %1146 = vmatprep.subr.mxu0 0.0
    %1147 = vmatpush1.msra.mxu0 0.0
    %1148 = vmatprep.subr.mxu0 0.0
    %1149 = vmatpush1.msra.mxu0 0.0
    %1150 = vmatprep.subr.mxu0 0.0
    %1151 = vmatpush1.msra.mxu0 0.0
    %1152 = vmatprep.subr.mxu0 0.0
    %1153 = vmatpush1.msra.mxu0 0.0
    %1154 = vmatprep.subr.mxu0 0.0
    %1155 = vmatpush1.msra.mxu0 0.0
    %1156 = vmatprep.subr.mxu0 0.0
    %1157 = vmatpush1.msra.mxu0 0.0
    %1158 = vmatprep.subr.mxu0 0.0
    %1159 = vmatpush1.msra.mxu0 0.0
    %1160 = vmatprep.subr.mxu0 0.0
    %1161 = vmatpush1.msra.mxu0 0.0
    %1162 = vmatprep.subr.mxu0 0.0
    %1163 = vmatpush1.msra.mxu0 0.0
    %1164 = vmatprep.subr.mxu0 0.0
    %1165 = vmatpush1.msra.mxu0 0.0
    %1166 = vmatprep.subr.mxu0 0.0
    %1167 = vmatpush1.msra.mxu0 0.0
    %1168 = vmatprep.subr.mxu0 0.0
    %1169 = vmatpush1.msra.mxu0 0.0
    %1170 = vmatprep.subr.mxu0 0.0
    %1171 = vmatpush1.msra.mxu0 0.0
    %1172 = vmatprep.subr.mxu0 0.0
    %1173 = vmatpush1.msra.mxu0 0.0
    %1174 = vmatprep.subr.mxu0 0.0
    %1175 = vmatpush1.msra.mxu0 0.0
    %1176 = vmatprep.subr.mxu0 0.0
    %1177 = vmatpush1.msra.mxu0 0.0
    %1178 = vmatprep.subr.mxu0 0.0
    %1179 = vmatpush1.msra.mxu0 0.0
    %1180 = vmatprep.subr.mxu0 0.0
    %1181 = vmatpush1.msra.mxu0 0.0
    %1182 = vmatprep.subr.mxu0 0.0
    %1183 = vmatpush1.msra.mxu0 0.0
    %1184 = vmatprep.subr.mxu0 0.0
    %1185 = vmatpush1.msra.mxu0 0.0
    %1186 = vmatprep.subr.mxu0 0.0
    %1187 = vmatpush1.msra.mxu0 0.0
    %1188 = vmatprep.mubr.f32.mxu0 0.0
    %1189 = vmatmul.mubr.f32.gmra.mrb[0].mxu0 %v1122
    %v1190 = vpop.f32.mrb[0].mxu0
    %v1191 = vadd.f32 0.0, %v1190
    %v1192 = vpop.f32.mrb[0].mxu0
    %1193 = vdwg.mxu0
    %1195 = vrot.lane.b32.xlu0 %v1191, 8
    %v1196 = vpop.permute.xlu0 %1195
    %1198 = vst.msk [vmem:[#allocation3 + $0x8] sm:$0xff] %vm520, %v1196
    %1199 = vrot.lane.b32.xlu0 %v182, 112
    %v1200 = vpop.permute.xlu0 %1199
    %1201 = vrot.lane.b32.xlu0 %v182, 80
    %v1202 = vpop.permute.xlu0 %1201
    %v1203 = vsel %vm188, %v1200, 0
    %v1205 = vsel %vm188, %v1202, 0
    %1207 = vmatprep.subr.mxu0 0.0
    %1208 = vmatpush1.xpose.msra.mxu0 %v1205
    %1209 = vmatprep.subr.mxu0 0.0
    %1210 = vmatpush1.xpose.msra.mxu0 0.0
    %1211 = vmatprep.subr.mxu0 0.0
    %1212 = vmatpush1.xpose.msra.mxu0 0.0
    %1213 = vmatprep.subr.mxu0 0.0
    %1214 = vmatpush1.xpose.msra.mxu0 0.0
    %1215 = vmatprep.subr.mxu0 0.0
    %1216 = vmatpush1.xpose.msra.mxu0 0.0
    %1217 = vmatprep.subr.mxu0 0.0
    %1218 = vmatpush1.xpose.msra.mxu0 0.0
    %1219 = vmatprep.subr.mxu0 0.0
    %1220 = vmatpush1.xpose.msra.mxu0 0.0
    %1221 = vmatprep.subr.mxu0 0.0
    %1222 = vmatpush1.xpose.msra.mxu0 0.0
    %1223 = vmatprep.subr.mxu0 0.0
    %1224 = vmatpush1.xpose.msra.mxu0 0.0
    %1225 = vmatprep.subr.mxu0 0.0
    %1226 = vmatpush1.xpose.msra.mxu0 0.0
    %1227 = vmatprep.subr.mxu0 0.0
    %1228 = vmatpush1.xpose.msra.mxu0 0.0
    %1229 = vmatprep.subr.mxu0 0.0
    %1230 = vmatpush1.xpose.msra.mxu0 0.0
    %1231 = vmatprep.subr.mxu0 0.0
    %1232 = vmatpush1.xpose.msra.mxu0 0.0
    %1233 = vmatprep.subr.mxu0 0.0
    %1234 = vmatpush1.xpose.msra.mxu0 0.0
    %1235 = vmatprep.subr.mxu0 0.0
    %1236 = vmatpush1.xpose.msra.mxu0 0.0
    %1237 = vmatprep.subr.mxu0 0.0
    %1238 = vmatpush1.xpose.msra.mxu0 0.0
    %1239 = vmatprep.subr.mxu0 0.0
    %1240 = vmatpush1.xpose.msra.mxu0 0.0
    %1241 = vmatprep.subr.mxu0 0.0
    %1242 = vmatpush1.xpose.msra.mxu0 0.0
    %1243 = vmatprep.subr.mxu0 0.0
    %1244 = vmatpush1.xpose.msra.mxu0 0.0
    %1245 = vmatprep.subr.mxu0 0.0
    %1246 = vmatpush1.xpose.msra.mxu0 0.0
    %1247 = vmatprep.subr.mxu0 0.0
    %1248 = vmatpush1.xpose.msra.mxu0 0.0
    %1249 = vmatprep.subr.mxu0 0.0
    %1250 = vmatpush1.xpose.msra.mxu0 0.0
    %1251 = vmatprep.subr.mxu0 0.0
    %1252 = vmatpush1.xpose.msra.mxu0 0.0
    %1253 = vmatprep.subr.mxu0 0.0
    %1254 = vmatpush1.xpose.msra.mxu0 0.0
    %1255 = vmatprep.subr.mxu0 0.0
    %1256 = vmatpush1.xpose.msra.mxu0 0.0
    %1257 = vmatprep.subr.mxu0 0.0
    %1258 = vmatpush1.xpose.msra.mxu0 0.0
    %1259 = vmatprep.subr.mxu0 0.0
    %1260 = vmatpush1.xpose.msra.mxu0 0.0
    %1261 = vmatprep.subr.mxu0 0.0
    %1262 = vmatpush1.xpose.msra.mxu0 0.0
    %1263 = vmatprep.subr.mxu0 0.0
    %1264 = vmatpush1.xpose.msra.mxu0 0.0
    %1265 = vmatprep.subr.mxu0 0.0
    %1266 = vmatpush1.xpose.msra.mxu0 0.0
    %1267 = vmatprep.subr.mxu0 0.0
    %1268 = vmatpush1.xpose.msra.mxu0 0.0
    %1269 = vmatprep.subr.mxu0 0.0
    %1270 = vmatpush1.xpose.msra.mxu0 0.0
    %1271 = vmatprep.mubr.f32.mxu0 0.0
    %1272 = vmatmul.mubr.f32.gmra.mrb[0].mxu0 %v1203
    %v1273 = vpop.f32.mrb[0].mxu0
    %v1274 = vadd.f32 0.0, %v1273
    %v1275 = vpop.f32.mrb[0].mxu0
    %1276 = vdwg.mxu0
    %v1277 = vsel %vm188, %v1274, -inf
    %1278 = vmax.xlane.f32.xlu0 %v1277
    %v1279 = vpop.xlane.xlu0 %1278
    %v1280 = vsub.f32 %v1274, %v1279
    %v1281 = vmul.f32 %v1280, 1.442695
    %v1282 = vpow.pop %v1281
    %v1283 = vsel %vm188, %v1282, 0.0
    %1284 = vadd.xlane.f32.xlu0 %v1283
    %v1285 = vpop.xlane.xlu0 %1284
    %v1286 = vrcp.pop %v1285
    %v1287 = vmul.f32 %v1282, %v1286
    %1288 = vrot.lane.b32.xlu0 %v182, 48
    %v1289 = vpop.permute.xlu0 %1288
    %v1292 = vsel %vm188, %v1287, 0
    %1294 = vmatprep.subr.mxu0 0.0
    %1295 = vmatpush1.msra.mxu0 %v1289
    %1296 = vmatprep.subr.mxu0 0.0
    %1297 = vmatpush1.msra.mxu0 0.0
    %1298 = vmatprep.subr.mxu0 0.0
    %1299 = vmatpush1.msra.mxu0 0.0
    %1300 = vmatprep.subr.mxu0 0.0
    %1301 = vmatpush1.msra.mxu0 0.0
    %1302 = vmatprep.subr.mxu0 0.0
    %1303 = vmatpush1.msra.mxu0 0.0
    %1304 = vmatprep.subr.mxu0 0.0
    %1305 = vmatpush1.msra.mxu0 0.0
    %1306 = vmatprep.subr.mxu0 0.0
    %1307 = vmatpush1.msra.mxu0 0.0
    %1308 = vmatprep.subr.mxu0 0.0
    %1309 = vmatpush1.msra.mxu0 0.0
    %1310 = vmatprep.subr.mxu0 0.0
    %1311 = vmatpush1.msra.mxu0 0.0
    %1312 = vmatprep.subr.mxu0 0.0
    %1313 = vmatpush1.msra.mxu0 0.0
    %1314 = vmatprep.subr.mxu0 0.0
    %1315 = vmatpush1.msra.mxu0 0.0
    %1316 = vmatprep.subr.mxu0 0.0
    %1317 = vmatpush1.msra.mxu0 0.0
    %1318 = vmatprep.subr.mxu0 0.0
    %1319 = vmatpush1.msra.mxu0 0.0
    %1320 = vmatprep.subr.mxu0 0.0
    %1321 = vmatpush1.msra.mxu0 0.0
    %1322 = vmatprep.subr.mxu0 0.0
    %1323 = vmatpush1.msra.mxu0 0.0
    %1324 = vmatprep.subr.mxu0 0.0
    %1325 = vmatpush1.msra.mxu0 0.0
    %1326 = vmatprep.subr.mxu0 0.0
    %1327 = vmatpush1.msra.mxu0 0.0
    %1328 = vmatprep.subr.mxu0 0.0
    %1329 = vmatpush1.msra.mxu0 0.0
    %1330 = vmatprep.subr.mxu0 0.0
    %1331 = vmatpush1.msra.mxu0 0.0
    %1332 = vmatprep.subr.mxu0 0.0
    %1333 = vmatpush1.msra.mxu0 0.0
    %1334 = vmatprep.subr.mxu0 0.0
    %1335 = vmatpush1.msra.mxu0 0.0
    %1336 = vmatprep.subr.mxu0 0.0
    %1337 = vmatpush1.msra.mxu0 0.0
    %1338 = vmatprep.subr.mxu0 0.0
    %1339 = vmatpush1.msra.mxu0 0.0
    %1340 = vmatprep.subr.mxu0 0.0
    %1341 = vmatpush1.msra.mxu0 0.0
    %1342 = vmatprep.subr.mxu0 0.0
    %1343 = vmatpush1.msra.mxu0 0.0
    %1344 = vmatprep.subr.mxu0 0.0
    %1345 = vmatpush1.msra.mxu0 0.0
    %1346 = vmatprep.subr.mxu0 0.0
    %1347 = vmatpush1.msra.mxu0 0.0
    %1348 = vmatprep.subr.mxu0 0.0
    %1349 = vmatpush1.msra.mxu0 0.0
    %1350 = vmatprep.subr.mxu0 0.0
    %1351 = vmatpush1.msra.mxu0 0.0
    %1352 = vmatprep.subr.mxu0 0.0
    %1353 = vmatpush1.msra.mxu0 0.0
    %1354 = vmatprep.subr.mxu0 0.0
    %1355 = vmatpush1.msra.mxu0 0.0
    %1356 = vmatprep.subr.mxu0 0.0
    %1357 = vmatpush1.msra.mxu0 0.0
    %1358 = vmatprep.mubr.f32.mxu0 0.0
    %1359 = vmatmul.mubr.f32.gmra.mrb[0].mxu0 %v1292
    %v1360 = vpop.f32.mrb[0].mxu0
    %v1361 = vadd.f32 0.0, %v1360
    %v1362 = vpop.f32.mrb[0].mxu0
    %1363 = vdwg.mxu0
    %1365 = vrot.lane.b32.xlu0 %v1361, 16
    %v1366 = vpop.permute.xlu0 %1365
    %1368 = vst.msk [vmem:[#allocation3 + $0x8] sm:$0xff] %vm691, %v1366
    %1369 = vrot.lane.b32.xlu0 %v182, 104
    %v1370 = vpop.permute.xlu0 %1369
    %1371 = vrot.lane.b32.xlu0 %v182, 72
    %v1372 = vpop.permute.xlu0 %1371
    %v1373 = vsel %vm188, %v1370, 0
    %v1375 = vsel %vm188, %v1372, 0
    %1377 = vmatprep.subr.mxu0 0.0
    %1378 = vmatpush1.xpose.msra.mxu0 %v1375
    %1379 = vmatprep.subr.mxu0 0.0
    %1380 = vmatpush1.xpose.msra.mxu0 0.0
    %1381 = vmatprep.subr.mxu0 0.0
    %1382 = vmatpush1.xpose.msra.mxu0 0.0
    %1383 = vmatprep.subr.mxu0 0.0
    %1384 = vmatpush1.xpose.msra.mxu0 0.0
    %1385 = vmatprep.subr.mxu0 0.0
    %1386 = vmatpush1.xpose.msra.mxu0 0.0
    %1387 = vmatprep.subr.mxu0 0.0
    %1388 = vmatpush1.xpose.msra.mxu0 0.0
    %1389 = vmatprep.subr.mxu0 0.0
    %1390 = vmatpush1.xpose.msra.mxu0 0.0
    %1391 = vmatprep.subr.mxu0 0.0
    %1392 = vmatpush1.xpose.msra.mxu0 0.0
    %1393 = vmatprep.subr.mxu0 0.0
    %1394 = vmatpush1.xpose.msra.mxu0 0.0
    %1395 = vmatprep.subr.mxu0 0.0
    %1396 = vmatpush1.xpose.msra.mxu0 0.0
    %1397 = vmatprep.subr.mxu0 0.0
    %1398 = vmatpush1.xpose.msra.mxu0 0.0
    %1399 = vmatprep.subr.mxu0 0.0
    %1400 = vmatpush1.xpose.msra.mxu0 0.0
    %1401 = vmatprep.subr.mxu0 0.0
    %1402 = vmatpush1.xpose.msra.mxu0 0.0
    %1403 = vmatprep.subr.mxu0 0.0
    %1404 = vmatpush1.xpose.msra.mxu0 0.0
    %1405 = vmatprep.subr.mxu0 0.0
    %1406 = vmatpush1.xpose.msra.mxu0 0.0
    %1407 = vmatprep.subr.mxu0 0.0
    %1408 = vmatpush1.xpose.msra.mxu0 0.0
    %1409 = vmatprep.subr.mxu0 0.0
    %1410 = vmatpush1.xpose.msra.mxu0 0.0
    %1411 = vmatprep.subr.mxu0 0.0
    %1412 = vmatpush1.xpose.msra.mxu0 0.0
    %1413 = vmatprep.subr.mxu0 0.0
    %1414 = vmatpush1.xpose.msra.mxu0 0.0
    %1415 = vmatprep.subr.mxu0 0.0
    %1416 = vmatpush1.xpose.msra.mxu0 0.0
    %1417 = vmatprep.subr.mxu0 0.0
    %1418 = vmatpush1.xpose.msra.mxu0 0.0
    %1419 = vmatprep.subr.mxu0 0.0
    %1420 = vmatpush1.xpose.msra.mxu0 0.0
    %1421 = vmatprep.subr.mxu0 0.0
    %1422 = vmatpush1.xpose.msra.mxu0 0.0
    %1423 = vmatprep.subr.mxu0 0.0
    %1424 = vmatpush1.xpose.msra.mxu0 0.0
    %1425 = vmatprep.subr.mxu0 0.0
    %1426 = vmatpush1.xpose.msra.mxu0 0.0
    %1427 = vmatprep.subr.mxu0 0.0
    %1428 = vmatpush1.xpose.msra.mxu0 0.0
    %1429 = vmatprep.subr.mxu0 0.0
    %1430 = vmatpush1.xpose.msra.mxu0 0.0
    %1431 = vmatprep.subr.mxu0 0.0
    %1432 = vmatpush1.xpose.msra.mxu0 0.0
    %1433 = vmatprep.subr.mxu0 0.0
    %1434 = vmatpush1.xpose.msra.mxu0 0.0
    %1435 = vmatprep.subr.mxu0 0.0
    %1436 = vmatpush1.xpose.msra.mxu0 0.0
    %1437 = vmatprep.subr.mxu0 0.0
    %1438 = vmatpush1.xpose.msra.mxu0 0.0
    %1439 = vmatprep.subr.mxu0 0.0
    %1440 = vmatpush1.xpose.msra.mxu0 0.0
    %1441 = vmatprep.mubr.f32.mxu0 0.0
    %1442 = vmatmul.mubr.f32.gmra.mrb[0].mxu0 %v1373
    %v1443 = vpop.f32.mrb[0].mxu0
    %v1444 = vadd.f32 0.0, %v1443
    %v1445 = vpop.f32.mrb[0].mxu0
    %1446 = vdwg.mxu0
    %v1447 = vsel %vm188, %v1444, -inf
    %1448 = vmax.xlane.f32.xlu0 %v1447
    %v1449 = vpop.xlane.xlu0 %1448
    %v1450 = vsub.f32 %v1444, %v1449
    %v1451 = vmul.f32 %v1450, 1.442695
    %v1452 = vpow.pop %v1451
    %v1453 = vsel %vm188, %v1452, 0.0
    %1454 = vadd.xlane.f32.xlu0 %v1453
    %v1455 = vpop.xlane.xlu0 %1454
    %v1456 = vrcp.pop %v1455
    %v1457 = vmul.f32 %v1452, %v1456
    %1458 = vrot.lane.b32.xlu0 %v182, 40
    %v1459 = vpop.permute.xlu0 %1458
    %v1462 = vsel %vm188, %v1457, 0
    %1464 = vmatprep.subr.mxu0 0.0
    %1465 = vmatpush1.msra.mxu0 %v1459
    %1466 = vmatprep.subr.mxu0 0.0
    %1467 = vmatpush1.msra.mxu0 0.0
    %1468 = vmatprep.subr.mxu0 0.0
    %1469 = vmatpush1.msra.mxu0 0.0
    %1470 = vmatprep.subr.mxu0 0.0
    %1471 = vmatpush1.msra.mxu0 0.0
    %1472 = vmatprep.subr.mxu0 0.0
    %1473 = vmatpush1.msra.mxu0 0.0
    %1474 = vmatprep.subr.mxu0 0.0
    %1475 = vmatpush1.msra.mxu0 0.0
    %1476 = vmatprep.subr.mxu0 0.0
    %1477 = vmatpush1.msra.mxu0 0.0
    %1478 = vmatprep.subr.mxu0 0.0
    %1479 = vmatpush1.msra.mxu0 0.0
    %1480 = vmatprep.subr.mxu0 0.0
    %1481 = vmatpush1.msra.mxu0 0.0
    %1482 = vmatprep.subr.mxu0 0.0
    %1483 = vmatpush1.msra.mxu0 0.0
    %1484 = vmatprep.subr.mxu0 0.0
    %1485 = vmatpush1.msra.mxu0 0.0
    %1486 = vmatprep.subr.mxu0 0.0
    %1487 = vmatpush1.msra.mxu0 0.0
    %1488 = vmatprep.subr.mxu0 0.0
    %1489 = vmatpush1.msra.mxu0 0.0
    %1490 = vmatprep.subr.mxu0 0.0
    %1491 = vmatpush1.msra.mxu0 0.0
    %1492 = vmatprep.subr.mxu0 0.0
    %1493 = vmatpush1.msra.mxu0 0.0
    %1494 = vmatprep.subr.mxu0 0.0
    %1495 = vmatpush1.msra.mxu0 0.0
    %1496 = vmatprep.subr.mxu0 0.0
    %1497 = vmatpush1.msra.mxu0 0.0
    %1498 = vmatprep.subr.mxu0 0.0
    %1499 = vmatpush1.msra.mxu0 0.0
    %1500 = vmatprep.subr.mxu0 0.0
    %1501 = vmatpush1.msra.mxu0 0.0
    %1502 = vmatprep.subr.mxu0 0.0
    %1503 = vmatpush1.msra.mxu0 0.0
    %1504 = vmatprep.subr.mxu0 0.0
    %1505 = vmatpush1.msra.mxu0 0.0
    %1506 = vmatprep.subr.mxu0 0.0
    %1507 = vmatpush1.msra.mxu0 0.0
    %1508 = vmatprep.subr.mxu0 0.0
    %1509 = vmatpush1.msra.mxu0 0.0
    %1510 = vmatprep.subr.mxu0 0.0
    %1511 = vmatpush1.msra.mxu0 0.0
    %1512 = vmatprep.subr.mxu0 0.0
    %1513 = vmatpush1.msra.mxu0 0.0
    %1514 = vmatprep.subr.mxu0 0.0
    %1515 = vmatpush1.msra.mxu0 0.0
    %1516 = vmatprep.subr.mxu0 0.0
    %1517 = vmatpush1.msra.mxu0 0.0
    %1518 = vmatprep.subr.mxu0 0.0
    %1519 = vmatpush1.msra.mxu0 0.0
    %1520 = vmatprep.subr.mxu0 0.0
    %1521 = vmatpush1.msra.mxu0 0.0
    %1522 = vmatprep.subr.mxu0 0.0
    %1523 = vmatpush1.msra.mxu0 0.0
    %1524 = vmatprep.subr.mxu0 0.0
    %1525 = vmatpush1.msra.mxu0 0.0
    %1526 = vmatprep.subr.mxu0 0.0
    %1527 = vmatpush1.msra.mxu0 0.0
    %1528 = vmatprep.mubr.f32.mxu0 0.0
    %1529 = vmatmul.mubr.f32.gmra.mrb[0].mxu0 %v1462
    %v1530 = vpop.f32.mrb[0].mxu0
    %v1531 = vadd.f32 0.0, %v1530
    %v1532 = vpop.f32.mrb[0].mxu0
    %1533 = vdwg.mxu0
    %1535 = vrot.lane.b32.xlu0 %v1531, 24
    %v1536 = vpop.permute.xlu0 %1535
    %1538 = vst.msk [vmem:[#allocation3 + $0x8] sm:$0xff] %vm862, %v1536
    %v1539 = vld [vmem:[#allocation3] sm:$0xff]
    %v1540 = vld [vmem:[#allocation3 + $0x8] sm:$0xff]
    %v1541 = vpack.c.bf16 %v1540, %v1539
    %v1542 = vld [vmem:[%s5] sm:$0xf]
    %v1543 = vld [vmem:[%s5 + $0x4] sm:$0xf]
    %v1544 = vld [vmem:[%s5 + $0x8] sm:$0xf]
    %v1545 = vld [vmem:[%s5 + $0xc] sm:$0xf]
    %v1546 = vld [vmem:[%s6] sm:$0x1]
    %v1548 = vlaneseq
    %v1549 = vshrl.u32 %v1548, 7
    %v1550 = vsub.s32 0, %v1549
    %v1551 = vrot.slane %v1546, %v1550
    %v1557 = vunpack.c.l.b16 %v1542
    %v1558 = vunpack.c.l.b16 %v1543
    %v1559 = vunpack.c.l.b16 %v1544
    %v1560 = vunpack.c.l.b16 %v1545
    %v1561 = vpack.c.b16 %v1558, %v1557
    %v1562 = vpack.c.b16 %v1560, %v1559
    %v1566 = vsel %vm59, %v1541, 0
    %1568 = vmatprep.subr.bf16.mxu0 0
    %1569 = vmatpush1.bf16.msra.mxu0 %v1561
    %1570 = vmatprep.subr.bf16.mxu0 0
    %1571 = vmatpush1.bf16.msra.mxu0 %v1562
    %1572 = vmatprep.subr.bf16.mxu0 0
    %1573 = vmatpush1.bf16.msra.mxu0 0
    %1574 = vmatprep.subr.bf16.mxu0 0
    %1575 = vmatpush1.bf16.msra.mxu0 0
    %1576 = vmatprep.subr.bf16.mxu0 0
    %1577 = vmatpush1.bf16.msra.mxu0 0
    %1578 = vmatprep.subr.bf16.mxu0 0
    %1579 = vmatpush1.bf16.msra.mxu0 0
    %1580 = vmatprep.subr.bf16.mxu0 0
    %1581 = vmatpush1.bf16.msra.mxu0 0
    %1582 = vmatprep.subr.bf16.mxu0 0
    %1583 = vmatpush1.bf16.msra.mxu0 0
    %1584 = vmatprep.subr.bf16.mxu0 0
    %1585 = vmatpush1.bf16.msra.mxu0 0
    %1586 = vmatprep.subr.bf16.mxu0 0
    %1587 = vmatpush1.bf16.msra.mxu0 0
    %1588 = vmatprep.subr.bf16.mxu0 0
    %1589 = vmatpush1.bf16.msra.mxu0 0
    %1590 = vmatprep.subr.bf16.mxu0 0
    %1591 = vmatpush1.bf16.msra.mxu0 0
    %1592 = vmatprep.subr.bf16.mxu0 0
    %1593 = vmatpush1.bf16.msra.mxu0 0
    %1594 = vmatprep.subr.bf16.mxu0 0
    %1595 = vmatpush1.bf16.msra.mxu0 0
    %1596 = vmatprep.subr.bf16.mxu0 0
    %1597 = vmatpush1.bf16.msra.mxu0 0
    %1598 = vmatprep.subr.bf16.mxu0 0
    %1599 = vmatpush1.bf16.msra.mxu0 0
    %1600 = vmatprep.mubr.bf16.mxu0 0
    %1601 = vmatmul.mubr.bf16.gmra.mrb[0].mxu0 %v1566
    %v1602 = vpop.f32.mrb[0].mxu0
    %v1603 = vadd.f32 %v1551, %v1602
    %v1604 = vpop.f32.mrb[0].mxu0
    %v1605 = vpop.f32.mrb[0].mxu0
    %v1606 = vadd.f32 %v1551, %v1605
    %v1607 = vpop.f32.mrb[0].mxu0
    %1608 = vdwg.mxu0
    %v1609 = vadd.f32 %v55, %v1603
    %v1610 = vadd.f32 %v56, %v1606
    %v1611 = vld [vmem:[%s7] sm:$0x1]
    %v1612 = vld [vmem:[%s8] sm:$0x1]
    %v1613 = vsel %vm59, %v1609, 0.0
    %1614 = vadd.xlane.f32.xlu0 %v1613
    %v1615 = vpop.xlane.xlu0 %1614
    %v1616 = vsel %vm59, %v1610, 0.0
    %1617 = vadd.xlane.f32.xlu0 %v1616
    %v1618 = vpop.xlane.xlu0 %1617
    %v1619 = vmul.f32 %v1615, %v66
    %v1620 = vmul.f32 %v1618, %v66
    %v1621 = vsub.f32 %v1609, %v1619
    %v1622 = vsub.f32 %v1610, %v1620
    %v1623 = vmul.f32 %v1621, %v1621
    %v1624 = vmul.f32 %v1622, %v1622
    %v1625 = vsel %vm59, %v1623, 0.0
    %1626 = vadd.xlane.f32.xlu0 %v1625
    %v1627 = vpop.xlane.xlu0 %1626
    %v1628 = vsel %vm59, %v1624, 0.0
    %1629 = vadd.xlane.f32.xlu0 %v1628
    %v1630 = vpop.xlane.xlu0 %1629
    %v1631 = vmul.f32 %v1627, 0.032258064
    %v1632 = vmul.f32 %v1630, 0.032258064
    %v1633 = vrsqrt.pop %v1631
    %v1634 = vmul.f32 %v1631, %v1633
    %vm1635 = vcmp.eq.f32.partialorder %v1631, inf
    %v1636 = vsel %vm1635, %v1631, %v1634
    %vm1637 = vcmp.eq.f32.partialorder %v1631, 0.0
    %v1638 = vand.u32 %v1631, 2147483648
    %v1639 = vsel %vm1637, %v1638, %v1636
    %v1640 = vrsqrt.pop %v1632
    %v1641 = vmul.f32 %v1632, %v1640
    %vm1642 = vcmp.eq.f32.partialorder %v1632, inf
    %v1643 = vsel %vm1642, %v1632, %v1641
    %vm1644 = vcmp.eq.f32.partialorder %v1632, 0.0
    %v1645 = vand.u32 %v1632, 2147483648
    %v1646 = vsel %vm1644, %v1645, %v1643
    %v1647 = vadd.f32 %v1639, 1e-06
    %v1648 = vadd.f32 %v1646, 1e-06
    %v1649 = vrcp.pop %v1647
    %v1650 = vmul.f32 %v1621, %v1649
    %v1651 = vrcp.pop %v1648
    %v1652 = vmul.f32 %v1622, %v1651
    %v1654 = vlaneseq
    %v1655 = vshrl.u32 %v1654, 7
    %v1656 = vsub.s32 0, %v1655
    %v1657 = vrot.slane %v1611, %v1656
    %v1659 = vmul.f32 %v1650, %v1657
    %v1660 = vmul.f32 %v1652, %v1657
    %v1662 = vlaneseq
    %v1663 = vshrl.u32 %v1662, 7
    %v1664 = vsub.s32 0, %v1663
    %v1665 = vrot.slane %v1612, %v1664
    %v1667 = vadd.f32 %v1659, %v1665
    %v1668 = vadd.f32 %v1660, %v1665
    %v1669 = vpack.c.bf16 %v1668, %v1667
    %v1670 = vld [vmem:[%s9] sm:$0xf]
    %v1671 = vld [vmem:[%s9 + $0x4] sm:$0xf]
    %v1672 = vld [vmem:[%s9 + $0x8] sm:$0xf]
    %v1673 = vld [vmem:[%s9 + $0xc] sm:$0xf]
    %v1674 = vld [vmem:[%s10] sm:$0x1]
    %v1676 = vlaneseq
    %v1677 = vshrl.u32 %v1676, 7
    %v1678 = vsub.s32 0, %v1677
    %v1679 = vrot.slane %v1674, %v1678
    %v1685 = vunpack.c.l.b16 %v1670
    %v1686 = vunpack.c.l.b16 %v1671
    %v1687 = vunpack.c.l.b16 %v1672
    %v1688 = vunpack.c.l.b16 %v1673
    %v1689 = vpack.c.b16 %v1686, %v1685
    %v1690 = vpack.c.b16 %v1688, %v1687
    %v1694 = vsel %vm59, %v1669, 0
    %1696 = vmatprep.subr.bf16.mxu0 0
    %1697 = vmatpush1.bf16.msra.mxu0 %v1689
    %1698 = vmatprep.subr.bf16.mxu0 0
    %1699 = vmatpush1.bf16.msra.mxu0 %v1690
    %1700 = vmatprep.subr.bf16.mxu0 0
    %1701 = vmatpush1.bf16.msra.mxu0 0
    %1702 = vmatprep.subr.bf16.mxu0 0
    %1703 = vmatpush1.bf16.msra.mxu0 0
    %1704 = vmatprep.subr.bf16.mxu0 0
    %1705 = vmatpush1.bf16.msra.mxu0 0
    %1706 = vmatprep.subr.bf16.mxu0 0
    %1707 = vmatpush1.bf16.msra.mxu0 0
    %1708 = vmatprep.subr.bf16.mxu0 0
    %1709 = vmatpush1.bf16.msra.mxu0 0
    %1710 = vmatprep.subr.bf16.mxu0 0
    %1711 = vmatpush1.bf16.msra.mxu0 0
    %1712 = vmatprep.subr.bf16.mxu0 0
    %1713 = vmatpush1.bf16.msra.mxu0 0
    %1714 = vmatprep.subr.bf16.mxu0 0
    %1715 = vmatpush1.bf16.msra.mxu0 0
    %1716 = vmatprep.subr.bf16.mxu0 0
    %1717 = vmatpush1.bf16.msra.mxu0 0
    %1718 = vmatprep.subr.bf16.mxu0 0
    %1719 = vmatpush1.bf16.msra.mxu0 0
    %1720 = vmatprep.subr.bf16.mxu0 0
    %1721 = vmatpush1.bf16.msra.mxu0 0
    %1722 = vmatprep.subr.bf16.mxu0 0
    %1723 = vmatpush1.bf16.msra.mxu0 0
    %1724 = vmatprep.subr.bf16.mxu0 0
    %1725 = vmatpush1.bf16.msra.mxu0 0
    %1726 = vmatprep.subr.bf16.mxu0 0
    %1727 = vmatpush1.bf16.msra.mxu0 0
    %1728 = vmatprep.mubr.bf16.mxu0 0
    %1729 = vmatmul.mubr.bf16.gmra.mrb[0].mxu0 %v1694
    %v1730 = vpop.f32.mrb[0].mxu0
    %v1731 = vadd.f32 %v1679, %v1730
    %v1732 = vpop.f32.mrb[0].mxu0
    %v1733 = vpop.f32.mrb[0].mxu0
    %v1734 = vadd.f32 %v1679, %v1733
    %v1735 = vpop.f32.mrb[0].mxu0
    %1736 = vdwg.mxu0
    %v1737 = vmul.f32 %v1731, 0.5
    %v1738 = vmul.f32 %v1734, 0.5
    %v1739 = vmul.f32 %v1731, 0.044715
    %v1740 = vmul.f32 %v1734, 0.044715
    %v1741 = vmul.f32 %v1739, %v1731
    %v1742 = vmul.f32 %v1740, %v1734
    %v1743 = vmul.f32 %v1741, %v1731
    %v1744 = vmul.f32 %v1742, %v1734
    %v1745 = vadd.f32 %v1731, %v1743
    %v1746 = vadd.f32 %v1734, %v1744
    %v1747 = vmul.f32 %v1745, 0.7978846
    %v1748 = vmul.f32 %v1746, 0.7978846
    %v1749 = vtanh.pop %v1747
    %v1750 = vtanh.pop %v1748
    %v1751 = vadd.f32 %v1749, 1.0
    %v1752 = vadd.f32 %v1750, 1.0
    %v1753 = vmul.f32 %v1737, %v1751
    %v1754 = vmul.f32 %v1738, %v1752
    %v1755 = vpack.c.bf16 %v1754, %v1753
    %v1756 = vld [vmem:[%s11] sm:$0xf]
    %v1757 = vld [vmem:[%s11 + $0x4] sm:$0xf]
    %v1758 = vld [vmem:[%s11 + $0x8] sm:$0xf]
    %v1759 = vld [vmem:[%s11 + $0xc] sm:$0xf]
    %v1760 = vld [vmem:[%s11 + $0x10] sm:$0xf]
    %v1761 = vld [vmem:[%s11 + $0x14] sm:$0xf]
    %v1762 = vld [vmem:[%s11 + $0x18] sm:$0xf]
    %v1763 = vld [vmem:[%s11 + $0x1c] sm:$0xf]
    %v1764 = vld [vmem:[%s11 + $0x20] sm:$0xf]
    %v1765 = vld [vmem:[%s11 + $0x24] sm:$0xf]
    %v1766 = vld [vmem:[%s11 + $0x28] sm:$0xf]
    %v1767 = vld [vmem:[%s11 + $0x2c] sm:$0xf]
    %v1768 = vld [vmem:[%s11 + $0x30] sm:$0xf]
    %v1769 = vld [vmem:[%s11 + $0x34] sm:$0xf]
    %v1770 = vld [vmem:[%s11 + $0x38] sm:$0xf]
    %v1771 = vld [vmem:[%s11 + $0x3c] sm:$0xf]
    %v1772 = vld [vmem:[%s12] sm:$0x1]
    %v1774 = vlaneseq
    %v1775 = vshrl.u32 %v1774, 7
    %v1776 = vsub.s32 0, %v1775
    %v1777 = vrot.slane %v1772, %v1776
    %v1795 = vunpack.c.l.b16 %v1756
    %v1796 = vunpack.c.l.b16 %v1757
    %v1797 = vunpack.c.l.b16 %v1758
    %v1798 = vunpack.c.l.b16 %v1759
    %v1799 = vunpack.c.l.b16 %v1760
    %v1800 = vunpack.c.l.b16 %v1761
    %v1801 = vunpack.c.l.b16 %v1762
    %v1802 = vunpack.c.l.b16 %v1763
    %v1803 = vunpack.c.l.b16 %v1764
    %v1804 = vunpack.c.l.b16 %v1765
    %v1805 = vunpack.c.l.b16 %v1766
    %v1806 = vunpack.c.l.b16 %v1767
    %v1807 = vunpack.c.l.b16 %v1768
    %v1808 = vunpack.c.l.b16 %v1769
    %v1809 = vunpack.c.l.b16 %v1770
    %v1810 = vunpack.c.l.b16 %v1771
    %v1811 = vpack.c.b16 %v1796, %v1795
    %v1812 = vpack.c.b16 %v1798, %v1797
    %v1813 = vpack.c.b16 %v1800, %v1799
    %v1814 = vpack.c.b16 %v1802, %v1801
    %v1815 = vpack.c.b16 %v1804, %v1803
    %v1816 = vpack.c.b16 %v1806, %v1805
    %v1817 = vpack.c.b16 %v1808, %v1807
    %v1818 = vpack.c.b16 %v1810, %v1809
    %1827 = vmatprep.subr.bf16.mxu0 0
    %1828 = vmatpush1.bf16.msra.mxu0 %v1811
    %1829 = vmatprep.subr.bf16.mxu0 0
    %1830 = vmatpush1.bf16.msra.mxu0 %v1812
    %1831 = vmatprep.subr.bf16.mxu0 0
    %1832 = vmatpush1.bf16.msra.mxu0 %v1813
    %1833 = vmatprep.subr.bf16.mxu0 0
    %1834 = vmatpush1.bf16.msra.mxu0 %v1814
    %1835 = vmatprep.subr.bf16.mxu0 0
    %1836 = vmatpush1.bf16.msra.mxu0 %v1815
    %1837 = vmatprep.subr.bf16.mxu0 0
    %1838 = vmatpush1.bf16.msra.mxu0 %v1816
    %1839 = vmatprep.subr.bf16.mxu0 0
    %1840 = vmatpush1.bf16.msra.mxu0 %v1817
    %1841 = vmatprep.subr.bf16.mxu0 0
    %1842 = vmatpush1.bf16.msra.mxu0 %v1818
    %1843 = vmatprep.subr.bf16.mxu0 0
    %1844 = vmatpush1.bf16.msra.mxu0 0
    %1845 = vmatprep.subr.bf16.mxu0 0
    %1846 = vmatpush1.bf16.msra.mxu0 0
    %1847 = vmatprep.subr.bf16.mxu0 0
    %1848 = vmatpush1.bf16.msra.mxu0 0
    %1849 = vmatprep.subr.bf16.mxu0 0
    %1850 = vmatpush1.bf16.msra.mxu0 0
    %1851 = vmatprep.subr.bf16.mxu0 0
    %1852 = vmatpush1.bf16.msra.mxu0 0
    %1853 = vmatprep.subr.bf16.mxu0 0
    %1854 = vmatpush1.bf16.msra.mxu0 0
    %1855 = vmatprep.subr.bf16.mxu0 0
    %1856 = vmatpush1.bf16.msra.mxu0 0
    %1857 = vmatprep.subr.bf16.mxu0 0
    %1858 = vmatpush1.bf16.msra.mxu0 0
    %1859 = vmatprep.mubr.bf16.mxu0 0
    %1860 = vmatmul.mubr.bf16.gmra.mrb[0].mxu0 %v1755
    %v1861 = vpop.f32.mrb[0].mxu0
    %v1862 = vadd.f32 %v1777, %v1861
    %v1863 = vpop.f32.mrb[0].mxu0
    %v1864 = vpop.f32.mrb[0].mxu0
    %v1865 = vadd.f32 %v1777, %v1864
    %v1866 = vpop.f32.mrb[0].mxu0
    %1867 = vdwg.mxu0
    %v1868 = vadd.f32 %v1609, %v1862
    %v1869 = vadd.f32 %v1610, %v1865
    %1870 = vst.msk [vmem:[#allocation2] sm:$0xff] %vm59, %v1868
    %1871 = vst.msk [vmem:[#allocation2 + $0x8] sm:$0xff] %vm59, %v1869
    // Predicated region
    $region58: #{bert_forward_pallas.1} parent=1 // pred_check
      %p1872 = pneg %p46
    $region59: #{bert_forward_pallas.1} parent=1 // pred_check_branch
      %1874 = sbr.rel (%p1872) target = $region61
    $region60: #{bert_forward_pallas.1} parent=1 // pred_region
      %1875 = vst.msk [vmem:[#allocation4] sm:$0xff] %vm59, %v1868
      %1876 = vst.msk [vmem:[#allocation4 + $0x8] sm:$0xff] %vm59, %v1869
    $region61: #{bert_forward_pallas.1} parent=1 // pred_fallthru
      _
    // Predicated region
    $region62: #{bert_forward_pallas.1} parent=1 // pred_check
      _
    $region63: #{bert_forward_pallas.1} parent=1 // pred_check_branch
      %1878 = sbr.rel (0) target = $region65
    $region64: #{bert_forward_pallas.1} parent=1 // pred_region
      %s1880 = ssub.s32 256, 256
      %1881 = vsyncadd [#allocation5], %s1880
      %s1882 = sshll.u32 [#allocation4], 4
      %s1883 = int_to_ptr.vmem [resolvable:$true] %s1882
      %1888 = dma.vmem_to_hbm [thread:$0]  %s1883, 256, %s13, [#allocation5], 128, 128, 8
    $region65: #{bert_forward_pallas.1} parent=1 // pred_fallthru
      _
    // Predicated region
    $region66: #{bert_forward_pallas.1} parent=1 // pred_check
      _
    $region67: #{bert_forward_pallas.1} parent=1 // pred_check_branch
      %1890 = sbr.rel (0) target = $region69
    $region68: #{bert_forward_pallas.1} parent=1 // pred_region
      %1891 = dma.done [#allocation5], 256
    $region69: #{bert_forward_pallas.1} parent=1 // pred_fallthru
      _
    %1892 = vsyncpa [#allocation5], 1

</llo_original>
